<compile_context>
chip_gen: v7x
topology: tpu7x:2x2x1
jax: 0.10.0
libtpu: 0.0.40
codegen_flags: <defaults>
</compile_context>

<pallas_src>
import functools

import jax
import jax.numpy as jnp
import numpy as np
from jax import lax
from jax.experimental import pallas as pl
from jax.experimental.pallas import tpu as pltpu

BN_EPS = 1e-5


def _choose_tile(nl: int, max_tile: int) -> int:
    """Largest multiple of 128 that divides nl and is <= max_tile (fallback: nl)."""
    if nl % 128 != 0:
        return nl                      # single-block fallback (still correct)
    best = 128
    t = 128
    while t <= min(max_tile, nl):
        if nl % t == 0:
            best = t
        t += 128
    return best


# --------------------------------------------------------------------------
# Fused kernel: (folded c1+BN) -> PReLU -> two fused gated dilated convs
#               -> split c2 -> residual add.
# --------------------------------------------------------------------------
def _make_main_kernel(*, L, TL, HW, r, M, cdt):
    def kernel(xp_ref, xc_ref, xn_ref, loc_ref,
               w1_ref, b1_ref, a1_ref,
               wg1_ref, gb1_ref, wg2_ref, gb2_ref,
               w2a_ref, w2b_ref, b2_ref, out_ref):
        alpha = a1_ref[0]                      # PReLU slope (SMEM scalar)
        w1 = w1_ref[...]                       # (64, Cin), already compute_dtype
        b1 = b1_ref[...]                       # (64, 1) f32 (BN folded in)

        def act(x_blk):                        # folded c1+bn1, then PReLU (f32 out)
            h = jnp.dot(w1, x_blk.astype(cdt),
                        preferred_element_type=jnp.float32) + b1
            return jnp.where(h >= 0, h, alpha * h)

        x_cur = xc_ref[...]                    # (Cin, TL) f32 (kept for residual)
        hc = act(x_cur)                        # (64, TL)  current tile
        hp = act(xp_ref[...])                  # (64, HW)  narrow prev halo
        hn = act(xn_ref[...])                  # (64, HW)  narrow next halo
        hc_c = hc.astype(cdt)                  # center rows of both gconv cats

        col = lax.broadcasted_iota(jnp.int32, (1, TL), 1)   # position inside tile
        loc = loc_ref[...]                                  # position inside batch item

        if TL > HW:
            pad = jnp.zeros((64, TL - HW), jnp.float32)     # shared halo padding
        else:
            pad = None

        def shifted(d):
            # value at (t - d): roll current tile; patch first d cols from the
            # narrow prev halo; zero each batch item's left edge (padding=dilation).
            hp_roll = pltpu.roll(hp, d, 1)
            hp_full = hp_roll if pad is None else jnp.concatenate([hp_roll, pad], axis=1)
            left = jnp.where(col < d, hp_full, pltpu.roll(hc, d, 1))
            left = jnp.where(loc < d, 0.0, left)
            # value at (t + d): roll the other way; patch last d cols from the
            # narrow next halo; zero each batch item's right edge.
            hn_roll = pltpu.roll(hn, (HW - d) % HW, 1)
            hn_full = hn_roll if pad is None else jnp.concatenate([pad, hn_roll], axis=1)
            right = jnp.where(col >= TL - d, hn_full, pltpu.roll(hc, (TL - d) % TL, 1))
            right = jnp.where(loc >= L - d, 0.0, right)
            return left, right

        def gconv(d, wg_ref, gb_ref):
            left, right = shifted(d)
            # (192, TL) built directly in compute_dtype; rows = [t-d ; t ; t+d].
            cat = jnp.concatenate(
                [left.astype(cdt), hc_c, right.astype(cdt)], axis=0)
            g = jnp.dot(wg_ref[...], cat,
                        preferred_element_type=jnp.float32) + gb_ref[...]   # (128, TL)
            return g[:64] * jax.nn.sigmoid(g[64:])                           # gated (64, TL)

        d1 = gconv(r, wg1_ref, gb1_ref)
        d2 = gconv(M, wg2_ref, gb2_ref)

        # c2 with w2 split in the wrapper: no (128, TL) concatenate.
        y = (jnp.dot(w2a_ref[...], d1.astype(cdt), preferred_element_type=jnp.float32)
             + jnp.dot(w2b_ref[...], d2.astype(cdt), preferred_element_type=jnp.float32)
             + b2_ref[...])
        out_ref[...] = (y + x_cur).astype(out_ref.dtype)

    return kernel


# --------------------------------------------------------------------------
# Wrapper
# --------------------------------------------------------------------------
def csr_res_block(x, params, *, r: int = 1, M: int = 5,
                  compute_dtype=jnp.bfloat16, max_tile: int = 1024,
                  vmem_limit_bytes: int = 32 * 1024 * 1024):
    """x: (N, Cin, L) float32, Cin == Cout (residual).

    compute_dtype=bf16 (default) feeds the MXU bf16 operands with f32
    accumulation on all TPU generations; pass jnp.float32 for a strict path.
    v5e/v6e: consider max_tile=2048..4096 and vmem_limit_bytes up to ~96 MiB.
    v7x: keep the defaults (64 MiB VMEM per TensorCore).
    """
    N, Cin, L = x.shape
    Cout = params["w2"].shape[0]
    assert Cin == Cout, "residual add requires in_channels == out_channels"
    assert 0 < r < L and 0 < M < L

    NL = N * L
    TL = _choose_tile(NL, max_tile)
    T = NL // TL
    HW = 128 if TL % 128 == 0 else TL          # narrow halo width
    assert max(r, M) < HW, "dilation halo must fit within one halo block"
    cdt = compute_dtype

    # NCL -> (C, N*L): batch collapsed onto the lane axis (layout plumbing).
    x2d = jnp.transpose(x, (1, 0, 2)).reshape(Cin, NL)
    # Per-position index inside its batch item (precomputed -> no vector mod in kernel).
    loc = (jnp.arange(NL, dtype=jnp.int32) % L).reshape(1, NL)

    # ---- BatchNorm batch statistics via x moments (tiny XLA prologue) -------
    # h = w1 @ x + b1 is affine in x, so mean/var of h follow from the centered
    # x moments (avoids E[h^2]-E[h]^2 cancellation and an extra kernel launch).
    w1 = params["w1"]
    b1 = params["b1"]
    mean_x = jnp.mean(x2d, axis=1, keepdims=True)                  # (Cin, 1)
    xc = x2d - mean_x
    cov_x = (xc @ xc.T) / float(NL)                                # (Cin, Cin), biased
    mu_h = w1 @ mean_x + b1                                        # (64, 1)
    var_h = jnp.sum((w1 @ cov_x) * w1, axis=1, keepdims=True)      # (64, 1)
    scale = params["g1"] * lax.rsqrt(var_h + BN_EPS)               # gamma / sqrt(var+eps)
    # Fold BN into c1 once: h*scale + shift == (scale*w1)@x + scale*(b1-mu) + beta.
    w1f = (scale * w1).astype(cdt)
    b1f = scale * (b1 - mu_h) + params["be1"]

    # Fuse gated-conv weights into MXU-friendly layouts (once, pre-cast to cdt):
    # rows = [branch_a(64); branch_b(64)], cols = [tap(t-d) | tap(t) | tap(t+d)].
    def fuse_gconv(wa, ba, wb, bb):
        wa2 = jnp.concatenate([wa[:, :, 0], wa[:, :, 1], wa[:, :, 2]], axis=1)
        wb2 = jnp.concatenate([wb[:, :, 0], wb[:, :, 1], wb[:, :, 2]], axis=1)
        return (jnp.concatenate([wa2, wb2], axis=0).astype(cdt),
                jnp.concatenate([ba, bb], axis=0))

    wg1, gb1 = fuse_gconv(params["wd1a"], params["bd1a"], params["wd1b"], params["bd1b"])
    wg2, gb2 = fuse_gconv(params["wd2a"], params["bd2a"], params["wd2b"], params["bd2b"])
    w2a = params["w2"][:, :64].astype(cdt)
    w2b = params["w2"][:, 64:].astype(cdt)
    b2 = params["b2"]
    a1 = params["a1"].reshape(1)

    bpt = TL // HW             # halo blocks per main tile
    nhb = NL // HW             # total halo blocks

    def resident(arr):
        return pl.BlockSpec(arr.shape, lambda t: (0, 0))

    kernel = _make_main_kernel(L=L, TL=TL, HW=HW, r=r, M=M, cdt=cdt)
    y2d = pl.pallas_call(
        kernel,
        grid=(T,),
        in_specs=[
            # narrow prev halo: last HW lanes of the previous tile (clamped; the
            # clamped/wrapped values are only read at positions the loc mask zeroes)
            pl.BlockSpec((Cin, HW), lambda t: (0, jnp.maximum(t * bpt - 1, 0))),
            pl.BlockSpec((Cin, TL), lambda t: (0, t)),                         # current
            # narrow next halo: first HW lanes of the next tile (clamped)
            pl.BlockSpec((Cin, HW), lambda t: (0, jnp.minimum((t + 1) * bpt, nhb - 1))),
            pl.BlockSpec((1, TL), lambda t: (0, t)),                           # local index
            resident(w1f), resident(b1f),
            pl.BlockSpec(memory_space=pltpu.MemorySpace.SMEM),                 # PReLU slope
            resident(wg1), resident(gb1), resident(wg2), resident(gb2),
            resident(w2a), resident(w2b), resident(b2),
        ],
        out_specs=pl.BlockSpec((Cout, TL), lambda t: (0, t)),
        out_shape=jax.ShapeDtypeStruct((Cout, NL), jnp.float32),
        compiler_params=pltpu.CompilerParams(
            dimension_semantics=("parallel",),
            vmem_limit_bytes=vmem_limit_bytes),
    )(x2d, x2d, x2d, loc,
      w1f, b1f, a1, wg1, gb1, wg2, gb2, w2a, w2b, b2)

    return y2d.reshape(Cout, N, L).transpose(1, 0, 2)


# --------------------------------------------------------------------------
# Pure-JAX reference (mirrors the PyTorch forward) for correctness checking.
# --------------------------------------------------------------------------
def ref_forward(x, p, *, r: int = 1, M: int = 5):
    def pw(w, b, h):
        return jnp.einsum("oc,ncl->nol", w, h) + b[None]

    h = pw(p["w1"], p["b1"], x)
    mu = h.mean((0, 2), keepdims=True)
    var = ((h - mu) ** 2).mean((0, 2), keepdims=True)
    h = (h - mu) / jnp.sqrt(var + BN_EPS) * p["g1"][None] + p["be1"][None]
    h = jnp.where(h >= 0, h, p["a1"][0, 0] * h)

    def gconv(hh, wa, ba, wb, bb, d):
        L = hh.shape[-1]
        hp = jnp.pad(hh, ((0, 0), (0, 0), (d, d)))

        def branch(w, b):
            return (jnp.einsum("oc,ncl->nol", w[:, :, 0], hp[..., 0:L])
                    + jnp.einsum("oc,ncl->nol", w[:, :, 1], hp[..., d:d + L])
                    + jnp.einsum("oc,ncl->nol", w[:, :, 2], hp[..., 2 * d:2 * d + L])
                    + b[None])

        return branch(wa, ba) * jax.nn.sigmoid(branch(wb, bb))

    d1 = gconv(h, p["wd1a"], p["bd1a"], p["wd1b"], p["bd1b"], r)
    d2 = gconv(h, p["wd2a"], p["bd2a"], p["wd2b"], p["bd2b"], M)
    cat = jnp.concatenate([d1, d2], axis=1)
    y = jnp.einsum("oc,ncl->nol", p["w2"], cat) + p["b2"][None]
    return y + x


def init_params(key, c_in, c_out):
    ks = jax.random.split(key, 12)
    f32 = jnp.float32
    return {
        "w1":   jax.random.normal(ks[0], (64, c_in), f32) * 0.1,
        "b1":   jax.random.normal(ks[1], (64, 1), f32) * 0.1,
        "g1":   jnp.ones((64, 1), f32),          # BatchNorm gamma default
        "be1":  jnp.zeros((64, 1), f32),         # BatchNorm beta default
        "a1":   jnp.full((1, 1), 0.25, f32),     # PReLU default slope
        "wd1a": jax.random.normal(ks[2], (64, 64, 3), f32) * 0.05,
        "bd1a": jax.random.normal(ks[3], (64, 1), f32) * 0.05,
        "wd1b": jax.random.normal(ks[4], (64, 64, 3), f32) * 0.05,
        "bd1b": jax.random.normal(ks[5], (64, 1), f32) * 0.05,
        "wd2a": jax.random.normal(ks[6], (64, 64, 3), f32) * 0.05,
        "bd2a": jax.random.normal(ks[7], (64, 1), f32) * 0.05,
        "wd2b": jax.random.normal(ks[8], (64, 64, 3), f32) * 0.05,
        "bd2b": jax.random.normal(ks[9], (64, 1), f32) * 0.05,
        "w2":   jax.random.normal(ks[10], (c_out, 128), f32) * 0.1,
        "b2":   jax.random.normal(ks[11], (c_out, 1), f32) * 0.1,
    }


if __name__ == "__main__":
    key = jax.random.PRNGKey(0)
    k_x, k_p = jax.random.split(key)

    # L chosen so a batch boundary falls INSIDE a 128-lane tile (exercises masks/halos).
    N, C, L = 2, 8, 192
    r, M = 1, 5

    x = jax.random.normal(k_x, (N, C, L), jnp.float32)
    params = init_params(k_p, C, C)
    ref = jax.block_until_ready(ref_forward(x, params, r=r, M=M))

    # Strict f32 path, forced multi-tile (3 tiles of 128 lanes, narrow halos).
    run_f32 = jax.jit(functools.partial(csr_res_block, r=r, M=M,
                                        compute_dtype=jnp.float32, max_tile=128))
    out = jax.block_until_ready(run_f32(x, params))
    np.testing.assert_allclose(np.asarray(out), np.asarray(ref), rtol=1e-4, atol=1e-4)

    # Default path: bf16 MXU operands (all generations), default tiling, looser tolerance.
    run_bf16 = jax.jit(functools.partial(csr_res_block, r=r, M=M))
    out_bf16 = jax.block_until_ready(run_bf16(x, params))
    np.testing.assert_allclose(np.asarray(out_bf16), np.asarray(ref), rtol=5e-2, atol=5e-2)

    print("KERNEL_OK")
</pallas_src>

<mosaic_0001>
module attributes {stable_mosaic.version = 11 : i64} {
  func.func @kernel(%arg0: i32, %arg1: memref<8x128xf32, #tpu.memory_space<vmem>>, %arg2: memref<8x128xf32, #tpu.memory_space<vmem>>, %arg3: memref<8x128xf32, #tpu.memory_space<vmem>>, %arg4: memref<1x128xi32, #tpu.memory_space<vmem>>, %arg5: memref<64x8xf32, #tpu.memory_space<vmem>>, %arg6: memref<64x1xf32, #tpu.memory_space<vmem>>, %arg7: memref<1xf32, #tpu.memory_space<smem>>, %arg8: memref<128x192xf32, #tpu.memory_space<vmem>>, %arg9: memref<128x1xf32, #tpu.memory_space<vmem>>, %arg10: memref<128x192xf32, #tpu.memory_space<vmem>>, %arg11: memref<128x1xf32, #tpu.memory_space<vmem>>, %arg12: memref<8x64xf32, #tpu.memory_space<vmem>>, %arg13: memref<8x64xf32, #tpu.memory_space<vmem>>, %arg14: memref<8x1xf32, #tpu.memory_space<vmem>>, %arg15: memref<8x128xf32, #tpu.memory_space<vmem>>) attributes {dimension_semantics = [#tpu.dimension_semantics<parallel>], iteration_bounds = array<i64: 3>, scalar_prefetch = 0 : i64, scratch_operands = 0 : i64, tpu.core_type = #tpu.core_type<tc>, window_params = [{transform_indices = @transform_0, window_bounds = array<i64: 8, 128>}, {transform_indices = @transform_1, window_bounds = array<i64: 8, 128>}, {transform_indices = @transform_2, window_bounds = array<i64: 8, 128>}, {transform_indices = @transform_3, window_bounds = array<i64: 1, 128>}, {pipeline_mode = #tpu.pipeline_mode<synchronous>, transform_indices = @transform_4, window_bounds = array<i64: 64, 8>}, {pipeline_mode = #tpu.pipeline_mode<synchronous>, transform_indices = @transform_5, window_bounds = array<i64: 64, 1>}, {transform_indices = @transform_6, window_bounds = array<i64: 1>}, {pipeline_mode = #tpu.pipeline_mode<synchronous>, transform_indices = @transform_7, window_bounds = array<i64: 128, 192>}, {pipeline_mode = #tpu.pipeline_mode<synchronous>, transform_indices = @transform_8, window_bounds = array<i64: 128, 1>}, {pipeline_mode = #tpu.pipeline_mode<synchronous>, transform_indices = @transform_9, window_bounds = array<i64: 128, 192>}, {pipeline_mode = #tpu.pipeline_mode<synchronous>, transform_indices = @transform_10, window_bounds = array<i64: 128, 1>}, {pipeline_mode = #tpu.pipeline_mode<synchronous>, transform_indices = @transform_11, window_bounds = array<i64: 8, 64>}, {pipeline_mode = #tpu.pipeline_mode<synchronous>, transform_indices = @transform_12, window_bounds = array<i64: 8, 64>}, {pipeline_mode = #tpu.pipeline_mode<synchronous>, transform_indices = @transform_13, window_bounds = array<i64: 8, 1>}, {transform_indices = @transform_14, window_bounds = array<i64: 8, 128>}]} {
    %c0 = arith.constant 0 : index
    %0 = memref.load %arg7[%c0] : memref<1xf32, #tpu.memory_space<smem>>
    %c0_0 = arith.constant 0 : index
    %c0_1 = arith.constant 0 : index
    %1 = vector.load %arg5[%c0_0, %c0_1] : memref<64x8xf32, #tpu.memory_space<vmem>>, vector<64x8xf32>
    %c0_2 = arith.constant 0 : index
    %c0_3 = arith.constant 0 : index
    %2 = vector.load %arg6[%c0_2, %c0_3] : memref<64x1xf32, #tpu.memory_space<vmem>>, vector<64x1xf32>
    %c0_4 = arith.constant 0 : index
    %c0_5 = arith.constant 0 : index
    %3 = vector.load %arg2[%c0_4, %c0_5] : memref<8x128xf32, #tpu.memory_space<vmem>>, vector<8x128xf32>
    %cst = arith.constant dense<0.000000e+00> : vector<64x128xf32>
    %4 = tpu.matmul %1, %3, %cst {dimension_numbers = #tpu.dot_dimension_numbers<[1], [0], [0], [1], [0, 0, 1, 1], [], []>} : vector<64x8xf32>, vector<8x128xf32>, vector<64x128xf32> -> vector<64x128xf32>
    %5 = vector.broadcast %2 : vector<64x1xf32> to vector<64x128xf32>
    %6 = arith.addf %4, %5 : vector<64x128xf32>
    %cst_6 = arith.constant 0.000000e+00 : f32
    %7 = vector.broadcast %cst_6 : f32 to vector<64x128xf32>
    %8 = arith.cmpf oge, %6, %7 : vector<64x128xf32>
    %9 = vector.broadcast %0 : f32 to vector<64x128xf32>
    %10 = arith.mulf %9, %6 : vector<64x128xf32>
    %11 = arith.select %8, %6, %10 : vector<64x128xi1>, vector<64x128xf32>
    %c0_7 = arith.constant 0 : index
    %c0_8 = arith.constant 0 : index
    %12 = vector.load %arg1[%c0_7, %c0_8] : memref<8x128xf32, #tpu.memory_space<vmem>>, vector<8x128xf32>
    %cst_9 = arith.constant dense<0.000000e+00> : vector<64x128xf32>
    %13 = tpu.matmul %1, %12, %cst_9 {dimension_numbers = #tpu.dot_dimension_numbers<[1], [0], [0], [1], [0, 0, 1, 1], [], []>} : vector<64x8xf32>, vector<8x128xf32>, vector<64x128xf32> -> vector<64x128xf32>
    %14 = vector.broadcast %2 : vector<64x1xf32> to vector<64x128xf32>
    %15 = arith.addf %13, %14 : vector<64x128xf32>
    %cst_10 = arith.constant 0.000000e+00 : f32
    %16 = vector.broadcast %cst_10 : f32 to vector<64x128xf32>
    %17 = arith.cmpf oge, %15, %16 : vector<64x128xf32>
    %18 = vector.broadcast %0 : f32 to vector<64x128xf32>
    %19 = arith.mulf %18, %15 : vector<64x128xf32>
    %20 = arith.select %17, %15, %19 : vector<64x128xi1>, vector<64x128xf32>
    %c0_11 = arith.constant 0 : index
    %c0_12 = arith.constant 0 : index
    %21 = vector.load %arg3[%c0_11, %c0_12] : memref<8x128xf32, #tpu.memory_space<vmem>>, vector<8x128xf32>
    %cst_13 = arith.constant dense<0.000000e+00> : vector<64x128xf32>
    %22 = tpu.matmul %1, %21, %cst_13 {dimension_numbers = #tpu.dot_dimension_numbers<[1], [0], [0], [1], [0, 0, 1, 1], [], []>} : vector<64x8xf32>, vector<8x128xf32>, vector<64x128xf32> -> vector<64x128xf32>
    %23 = vector.broadcast %2 : vector<64x1xf32> to vector<64x128xf32>
    %24 = arith.addf %22, %23 : vector<64x128xf32>
    %cst_14 = arith.constant 0.000000e+00 : f32
    %25 = vector.broadcast %cst_14 : f32 to vector<64x128xf32>
    %26 = arith.cmpf oge, %24, %25 : vector<64x128xf32>
    %27 = vector.broadcast %0 : f32 to vector<64x128xf32>
    %28 = arith.mulf %27, %24 : vector<64x128xf32>
    %29 = arith.select %26, %24, %28 : vector<64x128xi1>, vector<64x128xf32>
    %30 = tpu.iota {dimensions = array<i32: 1>} : vector<1x128xi32>
    %c0_15 = arith.constant 0 : index
    %c0_16 = arith.constant 0 : index
    %31 = vector.load %arg4[%c0_15, %c0_16] : memref<1x128xi32, #tpu.memory_space<vmem>>, vector<1x128xi32>
    %c1_i32 = arith.constant 1 : i32
    %32 = tpu.dynamic_rotate %20 by %c1_i32 dim 1 : vector<64x128xf32>, i32 -> vector<64x128xf32>
    %c1_i32_17 = arith.constant 1 : i32
    %33 = vector.broadcast %c1_i32_17 : i32 to vector<1x128xi32>
    %34 = arith.cmpi slt, %30, %33 : vector<1x128xi32>
    %c1_i32_18 = arith.constant 1 : i32
    %35 = tpu.dynamic_rotate %11 by %c1_i32_18 dim 1 : vector<64x128xf32>, i32 -> vector<64x128xf32>
    %36 = vector.shape_cast %34 : vector<1x128xi1> to vector<1x128xi1>
    %37 = vector.broadcast %36 : vector<1x128xi1> to vector<64x128xi1>
    %38 = arith.select %37, %32, %35 : vector<64x128xi1>, vector<64x128xf32>
    %c1_i32_19 = arith.constant 1 : i32
    %39 = vector.broadcast %c1_i32_19 : i32 to vector<1x128xi32>
    %40 = arith.cmpi slt, %31, %39 : vector<1x128xi32>
    %cst_20 = arith.constant 0.000000e+00 : f32
    %41 = vector.shape_cast %40 : vector<1x128xi1> to vector<1x128xi1>
    %42 = vector.broadcast %41 : vector<1x128xi1> to vector<64x128xi1>
    %43 = vector.broadcast %cst_20 : f32 to vector<64x128xf32>
    %44 = arith.select %42, %43, %38 : vector<64x128xi1>, vector<64x128xf32>
    %c127_i32 = arith.constant 127 : i32
    %45 = tpu.dynamic_rotate %29 by %c127_i32 dim 1 : vector<64x128xf32>, i32 -> vector<64x128xf32>
    %c127_i32_21 = arith.constant 127 : i32
    %46 = vector.broadcast %c127_i32_21 : i32 to vector<1x128xi32>
    %47 = arith.cmpi sge, %30, %46 : vector<1x128xi32>
    %c127_i32_22 = arith.constant 127 : i32
    %48 = tpu.dynamic_rotate %11 by %c127_i32_22 dim 1 : vector<64x128xf32>, i32 -> vector<64x128xf32>
    %49 = vector.shape_cast %47 : vector<1x128xi1> to vector<1x128xi1>
    %50 = vector.broadcast %49 : vector<1x128xi1> to vector<64x128xi1>
    %51 = arith.select %50, %45, %48 : vector<64x128xi1>, vector<64x128xf32>
    %c191_i32 = arith.constant 191 : i32
    %52 = vector.broadcast %c191_i32 : i32 to vector<1x128xi32>
    %53 = arith.cmpi sge, %31, %52 : vector<1x128xi32>
    %cst_23 = arith.constant 0.000000e+00 : f32
    %54 = vector.shape_cast %53 : vector<1x128xi1> to vector<1x128xi1>
    %55 = vector.broadcast %54 : vector<1x128xi1> to vector<64x128xi1>
    %56 = vector.broadcast %cst_23 : f32 to vector<64x128xf32>
    %57 = arith.select %55, %56, %51 : vector<64x128xi1>, vector<64x128xf32>
    %58 = tpu.concatenate %44, %11, %57 in 0 : vector<64x128xf32>, vector<64x128xf32>, vector<64x128xf32> -> vector<192x128xf32>
    %c0_24 = arith.constant 0 : index
    %c0_25 = arith.constant 0 : index
    %59 = vector.load %arg8[%c0_24, %c0_25] : memref<128x192xf32, #tpu.memory_space<vmem>>, vector<128x192xf32>
    %cst_26 = arith.constant dense<0.000000e+00> : vector<128x128xf32>
    %60 = tpu.matmul %59, %58, %cst_26 {dimension_numbers = #tpu.dot_dimension_numbers<[1], [0], [0], [1], [0, 0, 1, 1], [], []>} : vector<128x192xf32>, vector<192x128xf32>, vector<128x128xf32> -> vector<128x128xf32>
    %c0_27 = arith.constant 0 : index
    %c0_28 = arith.constant 0 : index
    %61 = vector.load %arg9[%c0_27, %c0_28] : memref<128x1xf32, #tpu.memory_space<vmem>>, vector<128x1xf32>
    %62 = vector.broadcast %61 : vector<128x1xf32> to vector<128x128xf32>
    %63 = arith.addf %60, %62 : vector<128x128xf32>
    %64 = vector.extract_strided_slice %63 {offsets = [0, 0], sizes = [64, 128], strides = [1, 1]} : vector<128x128xf32> to vector<64x128xf32>
    %65 = vector.extract_strided_slice %63 {offsets = [64, 0], sizes = [64, 128], strides = [1, 1]} : vector<128x128xf32> to vector<64x128xf32>
    %66 = arith.negf %65 : vector<64x128xf32>
    %67 = math.exp %66 : vector<64x128xf32>
    %cst_29 = arith.constant 1.000000e+00 : f32
    %68 = vector.broadcast %cst_29 : f32 to vector<64x128xf32>
    %69 = arith.addf %68, %67 : vector<64x128xf32>
    %70 = arith.divf %68, %69 : vector<64x128xf32>
    %71 = arith.mulf %64, %70 : vector<64x128xf32>
    %c5_i32 = arith.constant 5 : i32
    %72 = tpu.dynamic_rotate %20 by %c5_i32 dim 1 : vector<64x128xf32>, i32 -> vector<64x128xf32>
    %c5_i32_30 = arith.constant 5 : i32
    %73 = vector.broadcast %c5_i32_30 : i32 to vector<1x128xi32>
    %74 = arith.cmpi slt, %30, %73 : vector<1x128xi32>
    %c5_i32_31 = arith.constant 5 : i32
    %75 = tpu.dynamic_rotate %11 by %c5_i32_31 dim 1 : vector<64x128xf32>, i32 -> vector<64x128xf32>
    %76 = vector.shape_cast %74 : vector<1x128xi1> to vector<1x128xi1>
    %77 = vector.broadcast %76 : vector<1x128xi1> to vector<64x128xi1>
    %78 = arith.select %77, %72, %75 : vector<64x128xi1>, vector<64x128xf32>
    %c5_i32_32 = arith.constant 5 : i32
    %79 = vector.broadcast %c5_i32_32 : i32 to vector<1x128xi32>
    %80 = arith.cmpi slt, %31, %79 : vector<1x128xi32>
    %cst_33 = arith.constant 0.000000e+00 : f32
    %81 = vector.shape_cast %80 : vector<1x128xi1> to vector<1x128xi1>
    %82 = vector.broadcast %81 : vector<1x128xi1> to vector<64x128xi1>
    %83 = vector.broadcast %cst_33 : f32 to vector<64x128xf32>
    %84 = arith.select %82, %83, %78 : vector<64x128xi1>, vector<64x128xf32>
    %c123_i32 = arith.constant 123 : i32
    %85 = tpu.dynamic_rotate %29 by %c123_i32 dim 1 : vector<64x128xf32>, i32 -> vector<64x128xf32>
    %c123_i32_34 = arith.constant 123 : i32
    %86 = vector.broadcast %c123_i32_34 : i32 to vector<1x128xi32>
    %87 = arith.cmpi sge, %30, %86 : vector<1x128xi32>
    %c123_i32_35 = arith.constant 123 : i32
    %88 = tpu.dynamic_rotate %11 by %c123_i32_35 dim 1 : vector<64x128xf32>, i32 -> vector<64x128xf32>
    %89 = vector.shape_cast %87 : vector<1x128xi1> to vector<1x128xi1>
    %90 = vector.broadcast %89 : vector<1x128xi1> to vector<64x128xi1>
    %91 = arith.select %90, %85, %88 : vector<64x128xi1>, vector<64x128xf32>
    %c187_i32 = arith.constant 187 : i32
    %92 = vector.broadcast %c187_i32 : i32 to vector<1x128xi32>
    %93 = arith.cmpi sge, %31, %92 : vector<1x128xi32>
    %cst_36 = arith.constant 0.000000e+00 : f32
    %94 = vector.shape_cast %93 : vector<1x128xi1> to vector<1x128xi1>
    %95 = vector.broadcast %94 : vector<1x128xi1> to vector<64x128xi1>
    %96 = vector.broadcast %cst_36 : f32 to vector<64x128xf32>
    %97 = arith.select %95, %96, %91 : vector<64x128xi1>, vector<64x128xf32>
    %98 = tpu.concatenate %84, %11, %97 in 0 : vector<64x128xf32>, vector<64x128xf32>, vector<64x128xf32> -> vector<192x128xf32>
    %c0_37 = arith.constant 0 : index
    %c0_38 = arith.constant 0 : index
    %99 = vector.load %arg10[%c0_37, %c0_38] : memref<128x192xf32, #tpu.memory_space<vmem>>, vector<128x192xf32>
    %cst_39 = arith.constant dense<0.000000e+00> : vector<128x128xf32>
    %100 = tpu.matmul %99, %98, %cst_39 {dimension_numbers = #tpu.dot_dimension_numbers<[1], [0], [0], [1], [0, 0, 1, 1], [], []>} : vector<128x192xf32>, vector<192x128xf32>, vector<128x128xf32> -> vector<128x128xf32>
    %c0_40 = arith.constant 0 : index
    %c0_41 = arith.constant 0 : index
    %101 = vector.load %arg11[%c0_40, %c0_41] : memref<128x1xf32, #tpu.memory_space<vmem>>, vector<128x1xf32>
    %102 = vector.broadcast %101 : vector<128x1xf32> to vector<128x128xf32>
    %103 = arith.addf %100, %102 : vector<128x128xf32>
    %104 = vector.extract_strided_slice %103 {offsets = [0, 0], sizes = [64, 128], strides = [1, 1]} : vector<128x128xf32> to vector<64x128xf32>
    %105 = vector.extract_strided_slice %103 {offsets = [64, 0], sizes = [64, 128], strides = [1, 1]} : vector<128x128xf32> to vector<64x128xf32>
    %106 = arith.negf %105 : vector<64x128xf32>
    %107 = math.exp %106 : vector<64x128xf32>
    %cst_42 = arith.constant 1.000000e+00 : f32
    %108 = vector.broadcast %cst_42 : f32 to vector<64x128xf32>
    %109 = arith.addf %108, %107 : vector<64x128xf32>
    %110 = arith.divf %108, %109 : vector<64x128xf32>
    %111 = arith.mulf %104, %110 : vector<64x128xf32>
    %c0_43 = arith.constant 0 : index
    %c0_44 = arith.constant 0 : index
    %112 = vector.load %arg12[%c0_43, %c0_44] : memref<8x64xf32, #tpu.memory_space<vmem>>, vector<8x64xf32>
    %cst_45 = arith.constant dense<0.000000e+00> : vector<8x128xf32>
    %113 = tpu.matmul %112, %71, %cst_45 {dimension_numbers = #tpu.dot_dimension_numbers<[1], [0], [0], [1], [0, 0, 1, 1], [], []>} : vector<8x64xf32>, vector<64x128xf32>, vector<8x128xf32> -> vector<8x128xf32>
    %c0_46 = arith.constant 0 : index
    %c0_47 = arith.constant 0 : index
    %114 = vector.load %arg13[%c0_46, %c0_47] : memref<8x64xf32, #tpu.memory_space<vmem>>, vector<8x64xf32>
    %cst_48 = arith.constant dense<0.000000e+00> : vector<8x128xf32>
    %115 = tpu.matmul %114, %111, %cst_48 {dimension_numbers = #tpu.dot_dimension_numbers<[1], [0], [0], [1], [0, 0, 1, 1], [], []>} : vector<8x64xf32>, vector<64x128xf32>, vector<8x128xf32> -> vector<8x128xf32>
    %116 = arith.addf %113, %115 : vector<8x128xf32>
    %c0_49 = arith.constant 0 : index
    %c0_50 = arith.constant 0 : index
    %117 = vector.load %arg14[%c0_49, %c0_50] : memref<8x1xf32, #tpu.memory_space<vmem>>, vector<8x1xf32>
    %118 = vector.broadcast %117 : vector<8x1xf32> to vector<8x128xf32>
    %119 = arith.addf %116, %118 : vector<8x128xf32>
    %120 = arith.addf %119, %3 : vector<8x128xf32>
    %c0_51 = arith.constant 0 : index
    %c0_52 = arith.constant 0 : index
    %121 = vector.load %arg15[%c0_51, %c0_52] : memref<8x128xf32, #tpu.memory_space<vmem>>, vector<8x128xf32>
    tpu.vector_store %arg15[%c0_51, %c0_52], %120 {strides = array<i32>} : memref<8x128xf32, #tpu.memory_space<vmem>>, vector<8x128xf32>,
    return
  }
  func.func @transform_0(%arg0: i32) -> (i32, i32) {
    %c1_i32 = arith.constant 1 : i32
    %0 = arith.muli %arg0, %c1_i32 : i32
    %c1_i32_0 = arith.constant 1 : i32
    %1 = arith.subi %0, %c1_i32_0 : i32
    %c0_i32 = arith.constant 0 : i32
    %2 = arith.maxsi %1, %c0_i32 : i32
    %c0_i32_1 = arith.constant 0 : i32
    %c0_i32_2 = arith.constant 0 : i32
    return %c0_i32_1, %2 : i32, i32
  }
  func.func @transform_1(%arg0: i32) -> (i32, i32) {
    %c0_i32 = arith.constant 0 : i32
    %c0_i32_0 = arith.constant 0 : i32
    return %c0_i32, %arg0 : i32, i32
  }
  func.func @transform_2(%arg0: i32) -> (i32, i32) {
    %c1_i32 = arith.constant 1 : i32
    %0 = arith.addi %arg0, %c1_i32 : i32
    %c1_i32_0 = arith.constant 1 : i32
    %1 = arith.muli %0, %c1_i32_0 : i32
    %c2_i32 = arith.constant 2 : i32
    %2 = arith.minsi %1, %c2_i32 : i32
    %c0_i32 = arith.constant 0 : i32
    %c0_i32_1 = arith.constant 0 : i32
    return %c0_i32, %2 : i32, i32
  }
  func.func @transform_3(%arg0: i32) -> (i32, i32) {
    %c0_i32 = arith.constant 0 : i32
    %c0_i32_0 = arith.constant 0 : i32
    return %c0_i32, %arg0 : i32, i32
  }
  func.func @transform_4(%arg0: i32) -> (i32, i32) {
    %c0_i32 = arith.constant 0 : i32
    %c0_i32_0 = arith.constant 0 : i32
    %c0_i32_1 = arith.constant 0 : i32
    return %c0_i32, %c0_i32_0 : i32, i32
  }
  func.func @transform_5(%arg0: i32) -> (i32, i32) {
    %c0_i32 = arith.constant 0 : i32
    %c0_i32_0 = arith.constant 0 : i32
    %c0_i32_1 = arith.constant 0 : i32
    return %c0_i32, %c0_i32_0 : i32, i32
  }
  func.func @transform_6(%arg0: i32) -> i32 {
    %c0_i32 = arith.constant 0 : i32
    %c0_i32_0 = arith.constant 0 : i32
    return %c0_i32 : i32
  }
  func.func @transform_7(%arg0: i32) -> (i32, i32) {
    %c0_i32 = arith.constant 0 : i32
    %c0_i32_0 = arith.constant 0 : i32
    %c0_i32_1 = arith.constant 0 : i32
    return %c0_i32, %c0_i32_0 : i32, i32
  }
  func.func @transform_8(%arg0: i32) -> (i32, i32) {
    %c0_i32 = arith.constant 0 : i32
    %c0_i32_0 = arith.constant 0 : i32
    %c0_i32_1 = arith.constant 0 : i32
    return %c0_i32, %c0_i32_0 : i32, i32
  }
  func.func @transform_9(%arg0: i32) -> (i32, i32) {
    %c0_i32 = arith.constant 0 : i32
    %c0_i32_0 = arith.constant 0 : i32
    %c0_i32_1 = arith.constant 0 : i32
    return %c0_i32, %c0_i32_0 : i32, i32
  }
  func.func @transform_10(%arg0: i32) -> (i32, i32) {
    %c0_i32 = arith.constant 0 : i32
    %c0_i32_0 = arith.constant 0 : i32
    %c0_i32_1 = arith.constant 0 : i32
    return %c0_i32, %c0_i32_0 : i32, i32
  }
  func.func @transform_11(%arg0: i32) -> (i32, i32) {
    %c0_i32 = arith.constant 0 : i32
    %c0_i32_0 = arith.constant 0 : i32
    %c0_i32_1 = arith.constant 0 : i32
    return %c0_i32, %c0_i32_0 : i32, i32
  }
  func.func @transform_12(%arg0: i32) -> (i32, i32) {
    %c0_i32 = arith.constant 0 : i32
    %c0_i32_0 = arith.constant 0 : i32
    %c0_i32_1 = arith.constant 0 : i32
    return %c0_i32, %c0_i32_0 : i32, i32
  }
  func.func @transform_13(%arg0: i32) -> (i32, i32) {
    %c0_i32 = arith.constant 0 : i32
    %c0_i32_0 = arith.constant 0 : i32
    %c0_i32_1 = arith.constant 0 : i32
    return %c0_i32, %c0_i32_0 : i32, i32
  }
  func.func @transform_14(%arg0: i32) -> (i32, i32) {
    %c0_i32 = arith.constant 0 : i32
    %c0_i32_0 = arith.constant 0 : i32
    return %c0_i32, %arg0 : i32, i32
  }
}

</mosaic_0001>

<llo_original>
// kernel: csr_res_block.1
$region0: #{csr_res_block.1}
  #allocation0 [shape = 'u32[]', space=smem, size = 0x4, offset = 0x4, fixed_abs, tag = 'smem constant byte address 0x4 - core index']
  #allocation1 [shape = 'u32[144,128]{1,0:T(1,128)}', space=vmem, size = 0x12000, scoped, tag = 'internal scratch']
  #allocation2 [shape = 'f32[1]{0:T(128)S(6)}', space=smem, size = 0x200, scoped, tag = 'scoped memory for csr_res_block.1']
  %s0 = inlined_call_operand.vmem [shape: f32[8,384], index: 0, kind: input, shape index: {}, may-alias: {0,1,2}]
  %s1 = inlined_call_operand.vmem [shape: f32[8,384], index: 1, kind: input, shape index: {}, may-alias: {0,1,2}]
  %s2 = inlined_call_operand.vmem [shape: f32[8,384], index: 2, kind: input, shape index: {}, may-alias: {0,1,2}]
  %s3 = inlined_call_operand.vmem [shape: s32[1,384], index: 3, kind: input, shape index: {}]
  %s4 = inlined_call_operand.vmem [shape: f32[64,8], index: 4, kind: input, shape index: {}]
  %s5 = inlined_call_operand.vmem [shape: f32[64,1], index: 5, kind: input, shape index: {}]
  %s6 = inlined_call_operand.<no memory space> [shape: f32[1], index: 6, kind: input, shape index: {}]
  %s7 = inlined_call_operand.vmem [shape: f32[128,192], index: 7, kind: input, shape index: {}]
  %s8 = inlined_call_operand.vmem [shape: f32[128,1], index: 8, kind: input, shape index: {}]
  %s9 = inlined_call_operand.vmem [shape: f32[128,192], index: 9, kind: input, shape index: {}]
  %s10 = inlined_call_operand.vmem [shape: f32[128,1], index: 10, kind: input, shape index: {}]
  %s11 = inlined_call_operand.vmem [shape: f32[8,64], index: 11, kind: input, shape index: {}]
  %s12 = inlined_call_operand.vmem [shape: f32[8,64], index: 12, kind: input, shape index: {}]
  %s13 = inlined_call_operand.vmem [shape: f32[8,1], index: 13, kind: input, shape index: {}]
  %s14 = inlined_call_operand.vmem [shape: f32[8,384], index: 14, kind: output, shape index: {}]
  %s15 = sld [smem:[#allocation0]]
  $region89: #{csr_res_block.1} parent=0
    _
  %s17 = ssub.s32 1, %s15
  %s18 = scalar_select 0, %s17, %s15
  %19 = sst [smem:[#allocation2]] %s6
  loop: start=0, step=1, limit=5
  $region2: #{csr_res_block.1} parent=0 // loop_pre_header
    _
  $region3: #{csr_res_block.1} parent=0 // loop_header
    %s21 = sphi 0, %s25
    %p22 = scmp.ge.s32.totalorder %s21, 5
    %s37 = sphi 0, %s39
    %s40 = sphi 0, %s37
    %s41 = sphi 0, %s40
    %s57 = sphi 0, %s41
    %s63 = sphi 0, %s65
    %s66 = sphi 0, %s63
    %s67 = sphi 0, %s66
    %s83 = sphi 0, %s67
    %s95 = sphi 0, %s97
    %s98 = sphi 0, %s95
    %s99 = sphi 0, %s98
    %s115 = sphi 0, %s99
    %s121 = sphi 0, %s123
    %s124 = sphi 0, %s121
    %s125 = sphi 0, %s124
    %s141 = sphi 0, %s125
    %s145 = sphi 0, %s145
    %s147 = sphi 0, %s145
    %s148 = sphi 0, %s147
    %s162 = sphi 0, %s148
    %s166 = sphi 0, %s166
    %s168 = sphi 0, %s166
    %s169 = sphi 0, %s168
    %s183 = sphi 0, %s169
    %s187 = sphi 0, %s187
    %s189 = sphi 0, %s187
    %s190 = sphi 0, %s189
    %s204 = sphi 0, %s190
    %s208 = sphi 0, %s208
    %s210 = sphi 0, %s208
    %s211 = sphi 0, %s210
    %s225 = sphi 0, %s211
    %s229 = sphi 0, %s229
    %s231 = sphi 0, %s229
    %s232 = sphi 0, %s231
    %s246 = sphi 0, %s232
    %s250 = sphi 0, %s250
    %s252 = sphi 0, %s250
    %s253 = sphi 0, %s252
    %s267 = sphi 0, %s253
    %s271 = sphi 0, %s271
    %s273 = sphi 0, %s271
    %s274 = sphi 0, %s273
    %s288 = sphi 0, %s274
    %s292 = sphi 0, %s292
    %s294 = sphi 0, %s292
    %s295 = sphi 0, %s294
    %s309 = sphi 0, %s295
    %s313 = sphi 0, %s313
    %s315 = sphi 0, %s313
    %s316 = sphi 0, %s315
    %s330 = sphi 0, %s316
    %s334 = sphi 0, %s334
    %s336 = sphi 0, %s334
    %s337 = sphi 0, %s336
    %s351 = sphi 0, %s337
    %s357 = sphi 0, %s359
    %s360 = sphi 0, %s357
    %s361 = sphi 0, %s360
    %s377 = sphi 0, %s361
  $region4: #{csr_res_block.1} parent=0 // loop_header_branch
    %24 = sbr.rel (%p22) target = $region8
  $region5: #{csr_res_block.1} parent=0 // loop_body
    %s26 = ssub.s32 %s21, 1
    %s27 = ssub.s32 %s21, 2
    %s28 = sadd.s32 %s21, 1
    %s29 = ssub.s32 %s21, 1
    %p30 = scmp.gt.s32.totalorder %s29, 0
    %s31 = scalar_select %p30, %s29, 0
    %s32 = ssub.s32 %s28, 1
    %p33 = scmp.gt.s32.totalorder %s32, 0
    %s34 = scalar_select %p33, %s32, 0
    %s35 = ssub.s32 %s31, %s34
    %p36 = scmp.eq.s32.totalorder %s35, 0
    %s38 = sadd.s32 %s37, 1
    %s39 = scalar_select %p36, %s37, %s38
    %p42 = pneg %p36
    %p43 = scmp.eq.s32.totalorder %s21, 2
    %p44 = por %p42, %p43
    %p45 = scmp.ne.s32.totalorder %s37, %s40
    %p46 = scmp.eq.s32.totalorder %s21, 0
    %p47 = por %p45, %p46
    %p48 = scmp.ne.s32.totalorder %s37, %s40
    %p49 = scmp.eq.s32.totalorder %s26, 2
    %p50 = por %p48, %p49
    %p51 = scmp.ne.s32.totalorder %s40, %s41
    %p52 = scmp.eq.s32.totalorder %s26, 0
    %p53 = por %p51, %p52
    %p54 = scmp.ne.s32.totalorder %s40, %s41
    %p55 = scmp.eq.s32.totalorder %s27, 2
    %p56 = por %p54, %p55
    %p58 = scmp.ne.s32.totalorder %s41, %s57
    %p59 = scmp.eq.s32.totalorder %s27, 0
    %p60 = por %p58, %p59
    %s61 = ssub.s32 %s21, %s28
    %p62 = scmp.eq.s32.totalorder %s61, 0
    %s64 = sadd.s32 %s63, 1
    %s65 = scalar_select %p62, %s63, %s64
    %p68 = pneg %p62
    %p69 = scmp.eq.s32.totalorder %s21, 2
    %p70 = por %p68, %p69
    %p71 = scmp.ne.s32.totalorder %s63, %s66
    %p72 = scmp.eq.s32.totalorder %s21, 0
    %p73 = por %p71, %p72
    %p74 = scmp.ne.s32.totalorder %s63, %s66
    %p75 = scmp.eq.s32.totalorder %s26, 2
    %p76 = por %p74, %p75
    %p77 = scmp.ne.s32.totalorder %s66, %s67
    %p78 = scmp.eq.s32.totalorder %s26, 0
    %p79 = por %p77, %p78
    %p80 = scmp.ne.s32.totalorder %s66, %s67
    %p81 = scmp.eq.s32.totalorder %s27, 2
    %p82 = por %p80, %p81
    %p84 = scmp.ne.s32.totalorder %s67, %s83
    %p85 = scmp.eq.s32.totalorder %s27, 0
    %p86 = por %p84, %p85
    %s87 = sadd.s32 %s21, 1
    %p88 = scmp.lt.s32.totalorder %s87, 2
    %s89 = scalar_select %p88, %s87, 2
    %s90 = sadd.s32 %s28, 1
    %p91 = scmp.lt.s32.totalorder %s90, 2
    %s92 = scalar_select %p91, %s90, 2
    %s93 = ssub.s32 %s89, %s92
    %p94 = scmp.eq.s32.totalorder %s93, 0
    %s96 = sadd.s32 %s95, 1
    %s97 = scalar_select %p94, %s95, %s96
    %p100 = pneg %p94
    %p101 = scmp.eq.s32.totalorder %s21, 2
    %p102 = por %p100, %p101
    %p103 = scmp.ne.s32.totalorder %s95, %s98
    %p104 = scmp.eq.s32.totalorder %s21, 0
    %p105 = por %p103, %p104
    %p106 = scmp.ne.s32.totalorder %s95, %s98
    %p107 = scmp.eq.s32.totalorder %s26, 2
    %p108 = por %p106, %p107
    %p109 = scmp.ne.s32.totalorder %s98, %s99
    %p110 = scmp.eq.s32.totalorder %s26, 0
    %p111 = por %p109, %p110
    %p112 = scmp.ne.s32.totalorder %s98, %s99
    %p113 = scmp.eq.s32.totalorder %s27, 2
    %p114 = por %p112, %p113
    %p116 = scmp.ne.s32.totalorder %s99, %s115
    %p117 = scmp.eq.s32.totalorder %s27, 0
    %p118 = por %p116, %p117
    %s119 = ssub.s32 %s21, %s28
    %p120 = scmp.eq.s32.totalorder %s119, 0
    %s122 = sadd.s32 %s121, 1
    %s123 = scalar_select %p120, %s121, %s122
    %p126 = pneg %p120
    %p127 = scmp.eq.s32.totalorder %s21, 2
    %p128 = por %p126, %p127
    %p129 = scmp.ne.s32.totalorder %s121, %s124
    %p130 = scmp.eq.s32.totalorder %s21, 0
    %p131 = por %p129, %p130
    %p132 = scmp.ne.s32.totalorder %s121, %s124
    %p133 = scmp.eq.s32.totalorder %s26, 2
    %p134 = por %p132, %p133
    %p135 = scmp.ne.s32.totalorder %s124, %s125
    %p136 = scmp.eq.s32.totalorder %s26, 0
    %p137 = por %p135, %p136
    %p138 = scmp.ne.s32.totalorder %s124, %s125
    %p139 = scmp.eq.s32.totalorder %s27, 2
    %p140 = por %p138, %p139
    %p142 = scmp.ne.s32.totalorder %s125, %s141
    %p143 = scmp.eq.s32.totalorder %s27, 0
    %p144 = por %p142, %p143
    %s146 = sadd.s32 %s145, 1
    %p149 = scmp.eq.s32.totalorder %s21, 2
    %p150 = scmp.ne.s32.totalorder %s145, %s147
    %p151 = scmp.eq.s32.totalorder %s21, 0
    %p152 = por %p150, %p151
    %p153 = scmp.ne.s32.totalorder %s145, %s147
    %p154 = scmp.eq.s32.totalorder %s26, 2
    %p155 = por %p153, %p154
    %p156 = scmp.ne.s32.totalorder %s147, %s148
    %p157 = scmp.eq.s32.totalorder %s26, 0
    %p158 = por %p156, %p157
    %p159 = scmp.ne.s32.totalorder %s147, %s148
    %p160 = scmp.eq.s32.totalorder %s27, 2
    %p161 = por %p159, %p160
    %p163 = scmp.ne.s32.totalorder %s148, %s162
    %p164 = scmp.eq.s32.totalorder %s27, 0
    %p165 = por %p163, %p164
    %s167 = sadd.s32 %s166, 1
    %p170 = scmp.eq.s32.totalorder %s21, 2
    %p171 = scmp.ne.s32.totalorder %s166, %s168
    %p172 = scmp.eq.s32.totalorder %s21, 0
    %p173 = por %p171, %p172
    %p174 = scmp.ne.s32.totalorder %s166, %s168
    %p175 = scmp.eq.s32.totalorder %s26, 2
    %p176 = por %p174, %p175
    %p177 = scmp.ne.s32.totalorder %s168, %s169
    %p178 = scmp.eq.s32.totalorder %s26, 0
    %p179 = por %p177, %p178
    %p180 = scmp.ne.s32.totalorder %s168, %s169
    %p181 = scmp.eq.s32.totalorder %s27, 2
    %p182 = por %p180, %p181
    %p184 = scmp.ne.s32.totalorder %s169, %s183
    %p185 = scmp.eq.s32.totalorder %s27, 0
    %p186 = por %p184, %p185
    %s188 = sadd.s32 %s187, 1
    %p191 = scmp.eq.s32.totalorder %s21, 2
    %p192 = scmp.ne.s32.totalorder %s187, %s189
    %p193 = scmp.eq.s32.totalorder %s21, 0
    %p194 = por %p192, %p193
    %p195 = scmp.ne.s32.totalorder %s187, %s189
    %p196 = scmp.eq.s32.totalorder %s26, 2
    %p197 = por %p195, %p196
    %p198 = scmp.ne.s32.totalorder %s189, %s190
    %p199 = scmp.eq.s32.totalorder %s26, 0
    %p200 = por %p198, %p199
    %p201 = scmp.ne.s32.totalorder %s189, %s190
    %p202 = scmp.eq.s32.totalorder %s27, 2
    %p203 = por %p201, %p202
    %p205 = scmp.ne.s32.totalorder %s190, %s204
    %p206 = scmp.eq.s32.totalorder %s27, 0
    %p207 = por %p205, %p206
    %s209 = sadd.s32 %s208, 1
    %p212 = scmp.eq.s32.totalorder %s21, 2
    %p213 = scmp.ne.s32.totalorder %s208, %s210
    %p214 = scmp.eq.s32.totalorder %s21, 0
    %p215 = por %p213, %p214
    %p216 = scmp.ne.s32.totalorder %s208, %s210
    %p217 = scmp.eq.s32.totalorder %s26, 2
    %p218 = por %p216, %p217
    %p219 = scmp.ne.s32.totalorder %s210, %s211
    %p220 = scmp.eq.s32.totalorder %s26, 0
    %p221 = por %p219, %p220
    %p222 = scmp.ne.s32.totalorder %s210, %s211
    %p223 = scmp.eq.s32.totalorder %s27, 2
    %p224 = por %p222, %p223
    %p226 = scmp.ne.s32.totalorder %s211, %s225
    %p227 = scmp.eq.s32.totalorder %s27, 0
    %p228 = por %p226, %p227
    %s230 = sadd.s32 %s229, 1
    %p233 = scmp.eq.s32.totalorder %s21, 2
    %p234 = scmp.ne.s32.totalorder %s229, %s231
    %p235 = scmp.eq.s32.totalorder %s21, 0
    %p236 = por %p234, %p235
    %p237 = scmp.ne.s32.totalorder %s229, %s231
    %p238 = scmp.eq.s32.totalorder %s26, 2
    %p239 = por %p237, %p238
    %p240 = scmp.ne.s32.totalorder %s231, %s232
    %p241 = scmp.eq.s32.totalorder %s26, 0
    %p242 = por %p240, %p241
    %p243 = scmp.ne.s32.totalorder %s231, %s232
    %p244 = scmp.eq.s32.totalorder %s27, 2
    %p245 = por %p243, %p244
    %p247 = scmp.ne.s32.totalorder %s232, %s246
    %p248 = scmp.eq.s32.totalorder %s27, 0
    %p249 = por %p247, %p248
    %s251 = sadd.s32 %s250, 1
    %p254 = scmp.eq.s32.totalorder %s21, 2
    %p255 = scmp.ne.s32.totalorder %s250, %s252
    %p256 = scmp.eq.s32.totalorder %s21, 0
    %p257 = por %p255, %p256
    %p258 = scmp.ne.s32.totalorder %s250, %s252
    %p259 = scmp.eq.s32.totalorder %s26, 2
    %p260 = por %p258, %p259
    %p261 = scmp.ne.s32.totalorder %s252, %s253
    %p262 = scmp.eq.s32.totalorder %s26, 0
    %p263 = por %p261, %p262
    %p264 = scmp.ne.s32.totalorder %s252, %s253
    %p265 = scmp.eq.s32.totalorder %s27, 2
    %p266 = por %p264, %p265
    %p268 = scmp.ne.s32.totalorder %s253, %s267
    %p269 = scmp.eq.s32.totalorder %s27, 0
    %p270 = por %p268, %p269
    %s272 = sadd.s32 %s271, 1
    %p275 = scmp.eq.s32.totalorder %s21, 2
    %p276 = scmp.ne.s32.totalorder %s271, %s273
    %p277 = scmp.eq.s32.totalorder %s21, 0
    %p278 = por %p276, %p277
    %p279 = scmp.ne.s32.totalorder %s271, %s273
    %p280 = scmp.eq.s32.totalorder %s26, 2
    %p281 = por %p279, %p280
    %p282 = scmp.ne.s32.totalorder %s273, %s274
    %p283 = scmp.eq.s32.totalorder %s26, 0
    %p284 = por %p282, %p283
    %p285 = scmp.ne.s32.totalorder %s273, %s274
    %p286 = scmp.eq.s32.totalorder %s27, 2
    %p287 = por %p285, %p286
    %p289 = scmp.ne.s32.totalorder %s274, %s288
    %p290 = scmp.eq.s32.totalorder %s27, 0
    %p291 = por %p289, %p290
    %s293 = sadd.s32 %s292, 1
    %p296 = scmp.eq.s32.totalorder %s21, 2
    %p297 = scmp.ne.s32.totalorder %s292, %s294
    %p298 = scmp.eq.s32.totalorder %s21, 0
    %p299 = por %p297, %p298
    %p300 = scmp.ne.s32.totalorder %s292, %s294
    %p301 = scmp.eq.s32.totalorder %s26, 2
    %p302 = por %p300, %p301
    %p303 = scmp.ne.s32.totalorder %s294, %s295
    %p304 = scmp.eq.s32.totalorder %s26, 0
    %p305 = por %p303, %p304
    %p306 = scmp.ne.s32.totalorder %s294, %s295
    %p307 = scmp.eq.s32.totalorder %s27, 2
    %p308 = por %p306, %p307
    %p310 = scmp.ne.s32.totalorder %s295, %s309
    %p311 = scmp.eq.s32.totalorder %s27, 0
    %p312 = por %p310, %p311
    %s314 = sadd.s32 %s313, 1
    %p317 = scmp.eq.s32.totalorder %s21, 2
    %p318 = scmp.ne.s32.totalorder %s313, %s315
    %p319 = scmp.eq.s32.totalorder %s21, 0
    %p320 = por %p318, %p319
    %p321 = scmp.ne.s32.totalorder %s313, %s315
    %p322 = scmp.eq.s32.totalorder %s26, 2
    %p323 = por %p321, %p322
    %p324 = scmp.ne.s32.totalorder %s315, %s316
    %p325 = scmp.eq.s32.totalorder %s26, 0
    %p326 = por %p324, %p325
    %p327 = scmp.ne.s32.totalorder %s315, %s316
    %p328 = scmp.eq.s32.totalorder %s27, 2
    %p329 = por %p327, %p328
    %p331 = scmp.ne.s32.totalorder %s316, %s330
    %p332 = scmp.eq.s32.totalorder %s27, 0
    %p333 = por %p331, %p332
    %s335 = sadd.s32 %s334, 1
    %p338 = scmp.eq.s32.totalorder %s21, 2
    %p339 = scmp.ne.s32.totalorder %s334, %s336
    %p340 = scmp.eq.s32.totalorder %s21, 0
    %p341 = por %p339, %p340
    %p342 = scmp.ne.s32.totalorder %s334, %s336
    %p343 = scmp.eq.s32.totalorder %s26, 2
    %p344 = por %p342, %p343
    %p345 = scmp.ne.s32.totalorder %s336, %s337
    %p346 = scmp.eq.s32.totalorder %s26, 0
    %p347 = por %p345, %p346
    %p348 = scmp.ne.s32.totalorder %s336, %s337
    %p349 = scmp.eq.s32.totalorder %s27, 2
    %p350 = por %p348, %p349
    %p352 = scmp.ne.s32.totalorder %s337, %s351
    %p353 = scmp.eq.s32.totalorder %s27, 0
    %p354 = por %p352, %p353
    %s355 = ssub.s32 %s21, %s28
    %p356 = scmp.eq.s32.totalorder %s355, 0
    %s358 = sadd.s32 %s357, 1
    %s359 = scalar_select %p356, %s357, %s358
    %p362 = pneg %p356
    %p363 = scmp.eq.s32.totalorder %s21, 2
    %p364 = por %p362, %p363
    %p365 = scmp.ne.s32.totalorder %s357, %s360
    %p366 = scmp.eq.s32.totalorder %s21, 0
    %p367 = por %p365, %p366
    %p368 = scmp.ne.s32.totalorder %s357, %s360
    %p369 = scmp.eq.s32.totalorder %s26, 2
    %p370 = por %p368, %p369
    %p371 = scmp.ne.s32.totalorder %s360, %s361
    %p372 = scmp.eq.s32.totalorder %s26, 0
    %p373 = por %p371, %p372
    %p374 = scmp.ne.s32.totalorder %s360, %s361
    %p375 = scmp.eq.s32.totalorder %s27, 2
    %p376 = por %p374, %p375
    %p378 = scmp.ne.s32.totalorder %s361, %s377
    %p379 = scmp.eq.s32.totalorder %s27, 0
    %p380 = por %p378, %p379
    %p381 = scmp.le.s32.totalorder 1, %s21
    %p382 = scmp.lt.s32.totalorder %s21, 4
    %p383 = pnand %p381, %p382
    %p384 = pneg %p383
    // Predicated region
    $region9: #{csr_res_block.1} parent=5 // pred_check
      _
    $region10: #{csr_res_block.1} parent=5 // pred_check_branch
      %386 = sbr.rel (%p383) target = $region12
    $region11: #{csr_res_block.1} parent=5 // pred_region
      %s387 = ssub.s32 %s21, 1
      // Predicated region
      $region13: #{csr_res_block.1} parent=11 // pred_check
        %p388 = pneg %p158
      $region14: #{csr_res_block.1} parent=11 // pred_check_branch
        %390 = sbr.rel (%p388) target = $region16
      $region15: #{csr_res_block.1} parent=11 // pred_region
        _
      $region16: #{csr_res_block.1} parent=11 // pred_fallthru
        _
      // Predicated region
      $region17: #{csr_res_block.1} parent=11 // pred_check
        %p391 = pneg %p179
      $region18: #{csr_res_block.1} parent=11 // pred_check_branch
        %393 = sbr.rel (%p391) target = $region20
      $region19: #{csr_res_block.1} parent=11 // pred_region
        _
      $region20: #{csr_res_block.1} parent=11 // pred_fallthru
        _
      // Predicated region
      $region21: #{csr_res_block.1} parent=11 // pred_check
        %p394 = pneg %p200
      $region22: #{csr_res_block.1} parent=11 // pred_check_branch
        %396 = sbr.rel (%p394) target = $region24
      $region23: #{csr_res_block.1} parent=11 // pred_region
        _
      $region24: #{csr_res_block.1} parent=11 // pred_fallthru
        _
      // Predicated region
      $region25: #{csr_res_block.1} parent=11 // pred_check
        %p397 = pneg %p221
      $region26: #{csr_res_block.1} parent=11 // pred_check_branch
        %399 = sbr.rel (%p397) target = $region28
      $region27: #{csr_res_block.1} parent=11 // pred_region
        _
      $region28: #{csr_res_block.1} parent=11 // pred_fallthru
        _
      // Predicated region
      $region29: #{csr_res_block.1} parent=11 // pred_check
        %p400 = pneg %p242
      $region30: #{csr_res_block.1} parent=11 // pred_check_branch
        %402 = sbr.rel (%p400) target = $region32
      $region31: #{csr_res_block.1} parent=11 // pred_region
        _
      $region32: #{csr_res_block.1} parent=11 // pred_fallthru
        _
      // Predicated region
      $region33: #{csr_res_block.1} parent=11 // pred_check
        %p403 = pneg %p263
      $region34: #{csr_res_block.1} parent=11 // pred_check_branch
        %405 = sbr.rel (%p403) target = $region36
      $region35: #{csr_res_block.1} parent=11 // pred_region
        _
      $region36: #{csr_res_block.1} parent=11 // pred_fallthru
        _
      // Predicated region
      $region37: #{csr_res_block.1} parent=11 // pred_check
        %p406 = pneg %p284
      $region38: #{csr_res_block.1} parent=11 // pred_check_branch
        %408 = sbr.rel (%p406) target = $region40
      $region39: #{csr_res_block.1} parent=11 // pred_region
        _
      $region40: #{csr_res_block.1} parent=11 // pred_fallthru
        _
      // Predicated region
      $region41: #{csr_res_block.1} parent=11 // pred_check
        %p409 = pneg %p305
      $region42: #{csr_res_block.1} parent=11 // pred_check_branch
        %411 = sbr.rel (%p409) target = $region44
      $region43: #{csr_res_block.1} parent=11 // pred_region
        _
      $region44: #{csr_res_block.1} parent=11 // pred_fallthru
        _
      // Predicated region
      $region45: #{csr_res_block.1} parent=11 // pred_check
        %p412 = pneg %p326
      $region46: #{csr_res_block.1} parent=11 // pred_check_branch
        %414 = sbr.rel (%p412) target = $region48
      $region47: #{csr_res_block.1} parent=11 // pred_region
        _
      $region48: #{csr_res_block.1} parent=11 // pred_fallthru
        _
      // Predicated region
      $region49: #{csr_res_block.1} parent=11 // pred_check
        %p415 = pneg %p347
      $region50: #{csr_res_block.1} parent=11 // pred_check_branch
        %417 = sbr.rel (%p415) target = $region52
      $region51: #{csr_res_block.1} parent=11 // pred_region
        _
      $region52: #{csr_res_block.1} parent=11 // pred_fallthru
        _
    $region12: #{csr_res_block.1} parent=5 // pred_fallthru
      _
    %p418 = scmp.lt.s32.totalorder %s21, 3
    // Predicated region
    $region53: #{csr_res_block.1} parent=5 // pred_check
      %p419 = pneg %p418
    $region54: #{csr_res_block.1} parent=5 // pred_check_branch
      %421 = sbr.rel (%p419) target = $region56
    $region55: #{csr_res_block.1} parent=5 // pred_region
      // Predicated region
      $region57: #{csr_res_block.1} parent=55 // pred_check
        %p422 = pneg %p47
      $region58: #{csr_res_block.1} parent=55 // pred_check_branch
        %424 = sbr.rel (%p422) target = $region60
      $region59: #{csr_res_block.1} parent=55 // pred_region
        %s425 = ssub.s32 %s21, 1
        %p426 = scmp.gt.s32.totalorder %s425, 0
        %s427 = scalar_select %p426, %s425, 0
        %p428 = scmp.lt.s32.totalorder %s427, 2
        %s429 = scalar_select %p428, %s427, 2
        %s430 = smul.addr %s429, 8
        %s431 = scalar_lea.vmem %s0, %s430
        %s432 = ssub.s32 %s21, 1
        %p433 = scmp.gt.s32.totalorder %s432, 0
        %s434 = scalar_select %p433, %s432, 0
      $region60: #{csr_res_block.1} parent=55 // pred_fallthru
        _
      // Predicated region
      $region61: #{csr_res_block.1} parent=55 // pred_check
        %p435 = pneg %p73
      $region62: #{csr_res_block.1} parent=55 // pred_check_branch
        %437 = sbr.rel (%p435) target = $region64
      $region63: #{csr_res_block.1} parent=55 // pred_region
        %p438 = scmp.lt.s32.totalorder %s21, 2
        %s439 = scalar_select %p438, %s21, 2
        %s440 = smul.addr %s439, 8
        %s441 = scalar_lea.vmem %s1, %s440
      $region64: #{csr_res_block.1} parent=55 // pred_fallthru
        _
      // Predicated region
      $region65: #{csr_res_block.1} parent=55 // pred_check
        %p442 = pneg %p105
      $region66: #{csr_res_block.1} parent=55 // pred_check_branch
        %444 = sbr.rel (%p442) target = $region68
      $region67: #{csr_res_block.1} parent=55 // pred_region
        %s445 = sadd.s32 %s21, 1
        %p446 = scmp.lt.s32.totalorder %s445, 2
        %s447 = scalar_select %p446, %s445, 2
        %p448 = scmp.lt.s32.totalorder %s447, 2
        %s449 = scalar_select %p448, %s447, 2
        %s450 = smul.addr %s449, 8
        %s451 = scalar_lea.vmem %s2, %s450
        %s452 = sadd.s32 %s21, 1
        %p453 = scmp.lt.s32.totalorder %s452, 2
        %s454 = scalar_select %p453, %s452, 2
      $region68: #{csr_res_block.1} parent=55 // pred_fallthru
        _
      // Predicated region
      $region69: #{csr_res_block.1} parent=55 // pred_check
        %p455 = pneg %p131
      $region70: #{csr_res_block.1} parent=55 // pred_check_branch
        %457 = sbr.rel (%p455) target = $region72
      $region71: #{csr_res_block.1} parent=55 // pred_region
        %p458 = scmp.lt.s32.totalorder %s21, 2
        %s459 = scalar_select %p458, %s21, 2
        %s460 = scalar_lea.vmem %s3, %s459
      $region72: #{csr_res_block.1} parent=55 // pred_fallthru
        _
    $region56: #{csr_res_block.1} parent=5 // pred_fallthru
      _
    %p461 = scmp.le.s32.totalorder 1, %s21
    %p462 = scmp.lt.s32.totalorder %s21, 4
    %p463 = pnand %p461, %p462
    %p464 = pneg %p463
    // Predicated region
    $region73: #{csr_res_block.1} parent=5 // pred_check
      _
    $region74: #{csr_res_block.1} parent=5 // pred_check_branch
      %466 = sbr.rel (%p463) target = $region76
    $region75: #{csr_res_block.1} parent=5 // pred_region
      %s467 = ssub.s32 %s21, 1
      %s468 = ssub.s32 %s26, 1
      %p469 = scmp.gt.s32.totalorder %s468, 0
      %s470 = scalar_select %p469, %s468, 0
      %p471 = scmp.lt.s32.totalorder %s470, 2
      %s472 = scalar_select %p471, %s470, 2
      %s473 = smul.addr %s472, 8
      %s474 = scalar_lea.vmem %s0, %s473
      %p475 = pneg %p53
      %p476 = pneg %p50
      %p477 = scmp.lt.s32.totalorder %s26, 2
      %s478 = scalar_select %p477, %s26, 2
      %s479 = smul.addr %s478, 8
      %s480 = scalar_lea.vmem %s1, %s479
      %p481 = pneg %p79
      %p482 = pneg %p76
      %s483 = sadd.s32 %s26, 1
      %p484 = scmp.lt.s32.totalorder %s483, 2
      %s485 = scalar_select %p484, %s483, 2
      %p486 = scmp.lt.s32.totalorder %s485, 2
      %s487 = scalar_select %p486, %s485, 2
      %s488 = smul.addr %s487, 8
      %s489 = scalar_lea.vmem %s2, %s488
      %p490 = pneg %p111
      %p491 = pneg %p108
      %p492 = scmp.lt.s32.totalorder %s26, 2
      %s493 = scalar_select %p492, %s26, 2
      %s494 = scalar_lea.vmem %s3, %s493
      %p495 = pneg %p137
      %p496 = pneg %p134
      %p497 = pneg %p158
      %p498 = pneg %p155
      %p499 = pneg %p179
      %p500 = pneg %p176
      %p501 = pneg %p200
      %p502 = pneg %p197
      %p503 = pneg %p221
      %p504 = pneg %p218
      %p505 = pneg %p242
      %p506 = pneg %p239
      %p507 = pneg %p263
      %p508 = pneg %p260
      %p509 = pneg %p284
      %p510 = pneg %p281
      %p511 = pneg %p305
      %p512 = pneg %p302
      %p513 = pneg %p326
      %p514 = pneg %p323
      %p515 = pneg %p347
      %p516 = pneg %p344
      %p517 = pneg %p373
      %p518 = pneg %p370
      %p519 = scmp.lt.s32.totalorder %s26, 2
      %s520 = scalar_select %p519, %s26, 2
      %s521 = smul.addr %s520, 8
      %s522 = scalar_lea.vmem %s14, %s521
      %s523 = ssub.s32 %s26, 1
      %p524 = scmp.gt.s32.totalorder %s523, 0
      %s525 = scalar_select %p524, %s523, 0
      %p526 = scmp.lt.s32.totalorder %s525, 2
      %s527 = scalar_select %p526, %s525, 2
      %s528 = smul.addr %s527, 8
      %s529 = scalar_lea.vmem %s0, %s528
      %s530 = ssub.s32 %s26, 1
      %p531 = scmp.gt.s32.totalorder %s530, 0
      %s532 = scalar_select %p531, %s530, 0
      %p533 = scmp.lt.s32.totalorder %s26, 2
      %s534 = scalar_select %p533, %s26, 2
      %s535 = smul.addr %s534, 8
      %s536 = scalar_lea.vmem %s1, %s535
      %s537 = sadd.s32 %s26, 1
      %p538 = scmp.lt.s32.totalorder %s537, 2
      %s539 = scalar_select %p538, %s537, 2
      %p540 = scmp.lt.s32.totalorder %s539, 2
      %s541 = scalar_select %p540, %s539, 2
      %s542 = smul.addr %s541, 8
      %s543 = scalar_lea.vmem %s2, %s542
      %s544 = sadd.s32 %s26, 1
      %p545 = scmp.lt.s32.totalorder %s544, 2
      %s546 = scalar_select %p545, %s544, 2
      %p547 = scmp.lt.s32.totalorder %s26, 2
      %s548 = scalar_select %p547, %s26, 2
      %s549 = scalar_lea.vmem %s3, %s548
      %p550 = scmp.lt.s32.totalorder %s26, 2
      %s551 = scalar_select %p550, %s26, 2
      %s552 = smul.addr %s551, 8
      %s553 = scalar_lea.vmem %s14, %s552
      %s554 = sld [smem:[#allocation2]]
      %v555 = vld [vmem:[%s4] sm:$0xff]
      %v556 = vld [vmem:[%s4 + $0x8] sm:$0xff]
      %v557 = vld [vmem:[%s4 + $0x10] sm:$0xff]
      %v558 = vld [vmem:[%s4 + $0x18] sm:$0xff]
      %v559 = vld [vmem:[%s4 + $0x20] sm:$0xff]
      %v560 = vld [vmem:[%s4 + $0x28] sm:$0xff]
      %v561 = vld [vmem:[%s4 + $0x30] sm:$0xff]
      %v562 = vld [vmem:[%s4 + $0x38] sm:$0xff]
      %v563 = vld [vmem:[%s5] sm:$0xff]
      %v564 = vld [vmem:[%s5 + $0x8] sm:$0xff]
      %v565 = vld [vmem:[%s5 + $0x10] sm:$0xff]
      %v566 = vld [vmem:[%s5 + $0x18] sm:$0xff]
      %v567 = vld [vmem:[%s5 + $0x20] sm:$0xff]
      %v568 = vld [vmem:[%s5 + $0x28] sm:$0xff]
      %v569 = vld [vmem:[%s5 + $0x30] sm:$0xff]
      %v570 = vld [vmem:[%s5 + $0x38] sm:$0xff]
      %v571 = vld [vmem:[%s536] sm:$0xff]
      %573 = vset.pattern.permute.xlu0 0
      %574 = vperm.xlu0 %573, %v563
      %v575 = vpop.permute.xlu0 %574
      %578 = vset.pattern.permute.xlu0 0
      %579 = vperm.xlu0 %578, %v564
      %v580 = vpop.permute.xlu0 %579
      %583 = vset.pattern.permute.xlu0 0
      %584 = vperm.xlu0 %583, %v565
      %v585 = vpop.permute.xlu0 %584
      %588 = vset.pattern.permute.xlu0 0
      %589 = vperm.xlu0 %588, %v566
      %v590 = vpop.permute.xlu0 %589
      %593 = vset.pattern.permute.xlu0 0
      %594 = vperm.xlu0 %593, %v567
      %v595 = vpop.permute.xlu0 %594
      %598 = vset.pattern.permute.xlu0 0
      %599 = vperm.xlu0 %598, %v568
      %v600 = vpop.permute.xlu0 %599
      %603 = vset.pattern.permute.xlu0 0
      %604 = vperm.xlu0 %603, %v569
      %v605 = vpop.permute.xlu0 %604
      %608 = vset.pattern.permute.xlu0 0
      %609 = vperm.xlu0 %608, %v570
      %v610 = vpop.permute.xlu0 %609
      %vm612 = vcmask 64512
      %v614 = vsel %vm612, %v555, 0
      %v617 = vsel %vm612, %v556, 0
      %v620 = vsel %vm612, %v557, 0
      %v623 = vsel %vm612, %v558, 0
      %v626 = vsel %vm612, %v559, 0
      %v629 = vsel %vm612, %v560, 0
      %v632 = vsel %vm612, %v561, 0
      %v635 = vsel %vm612, %v562, 0
      %637 = vmatprep.subr.mxu0 0.0
      %638 = vmatpush1.msra.mxu0 %v571
      %639 = vmatprep.subr.mxu0 0.0
      %640 = vmatpush1.msra.mxu0 0.0
      %641 = vmatprep.subr.mxu0 0.0
      %642 = vmatpush1.msra.mxu0 0.0
      %643 = vmatprep.subr.mxu0 0.0
      %644 = vmatpush1.msra.mxu0 0.0
      %645 = vmatprep.subr.mxu0 0.0
      %646 = vmatpush1.msra.mxu0 0.0
      %647 = vmatprep.subr.mxu0 0.0
      %648 = vmatpush1.msra.mxu0 0.0
      %649 = vmatprep.subr.mxu0 0.0
      %650 = vmatpush1.msra.mxu0 0.0
      %651 = vmatprep.subr.mxu0 0.0
      %652 = vmatpush1.msra.mxu0 0.0
      %653 = vmatprep.subr.mxu0 0.0
      %654 = vmatpush1.msra.mxu0 0.0
      %655 = vmatprep.subr.mxu0 0.0
      %656 = vmatpush1.msra.mxu0 0.0
      %657 = vmatprep.subr.mxu0 0.0
      %658 = vmatpush1.msra.mxu0 0.0
      %659 = vmatprep.subr.mxu0 0.0
      %660 = vmatpush1.msra.mxu0 0.0
      %661 = vmatprep.subr.mxu0 0.0
      %662 = vmatpush1.msra.mxu0 0.0
      %663 = vmatprep.subr.mxu0 0.0
      %664 = vmatpush1.msra.mxu0 0.0
      %665 = vmatprep.subr.mxu0 0.0
      %666 = vmatpush1.msra.mxu0 0.0
      %667 = vmatprep.subr.mxu0 0.0
      %668 = vmatpush1.msra.mxu0 0.0
      %669 = vmatprep.subr.mxu0 0.0
      %670 = vmatpush1.msra.mxu0 0.0
      %671 = vmatprep.subr.mxu0 0.0
      %672 = vmatpush1.msra.mxu0 0.0
      %673 = vmatprep.subr.mxu0 0.0
      %674 = vmatpush1.msra.mxu0 0.0
      %675 = vmatprep.subr.mxu0 0.0
      %676 = vmatpush1.msra.mxu0 0.0
      %677 = vmatprep.subr.mxu0 0.0
      %678 = vmatpush1.msra.mxu0 0.0
      %679 = vmatprep.subr.mxu0 0.0
      %680 = vmatpush1.msra.mxu0 0.0
      %681 = vmatprep.subr.mxu0 0.0
      %682 = vmatpush1.msra.mxu0 0.0
      %683 = vmatprep.subr.mxu0 0.0
      %684 = vmatpush1.msra.mxu0 0.0
      %685 = vmatprep.subr.mxu0 0.0
      %686 = vmatpush1.msra.mxu0 0.0
      %687 = vmatprep.subr.mxu0 0.0
      %688 = vmatpush1.msra.mxu0 0.0
      %689 = vmatprep.subr.mxu0 0.0
      %690 = vmatpush1.msra.mxu0 0.0
      %691 = vmatprep.subr.mxu0 0.0
      %692 = vmatpush1.msra.mxu0 0.0
      %693 = vmatprep.subr.mxu0 0.0
      %694 = vmatpush1.msra.mxu0 0.0
      %695 = vmatprep.subr.mxu0 0.0
      %696 = vmatpush1.msra.mxu0 0.0
      %697 = vmatprep.subr.mxu0 0.0
      %698 = vmatpush1.msra.mxu0 0.0
      %699 = vmatprep.subr.mxu0 0.0
      %700 = vmatpush1.msra.mxu0 0.0
      %701 = vmatprep.mubr.f32.mxu0 0.0
      %702 = vmatmul.mubr.f32.gmra.mrb[0].mxu0 %v614
      %v703 = vpop.f32.mrb[0].mxu0
      %v704 = vadd.f32 %v575, %v703
      %v705 = vpop.f32.mrb[0].mxu0
      %706 = vmatprep.mubr.f32.mxu0 0.0
      %707 = vmatmul.mubr.f32.gmra.mrb[0].mxu0 %v617
      %v708 = vpop.f32.mrb[0].mxu0
      %v709 = vadd.f32 %v580, %v708
      %v710 = vpop.f32.mrb[0].mxu0
      %711 = vmatprep.mubr.f32.mxu0 0.0
      %712 = vmatmul.mubr.f32.gmra.mrb[0].mxu0 %v620
      %v713 = vpop.f32.mrb[0].mxu0
      %v714 = vadd.f32 %v585, %v713
      %v715 = vpop.f32.mrb[0].mxu0
      %716 = vmatprep.mubr.f32.mxu0 0.0
      %717 = vmatmul.mubr.f32.gmra.mrb[0].mxu0 %v623
      %v718 = vpop.f32.mrb[0].mxu0
      %v719 = vadd.f32 %v590, %v718
      %v720 = vpop.f32.mrb[0].mxu0
      %721 = vmatprep.mubr.f32.mxu0 0.0
      %722 = vmatmul.mubr.f32.gmra.mrb[0].mxu0 %v626
      %v723 = vpop.f32.mrb[0].mxu0
      %v724 = vadd.f32 %v595, %v723
      %v725 = vpop.f32.mrb[0].mxu0
      %726 = vmatprep.mubr.f32.mxu0 0.0
      %727 = vmatmul.mubr.f32.gmra.mrb[0].mxu0 %v629
      %v728 = vpop.f32.mrb[0].mxu0
      %v729 = vadd.f32 %v600, %v728
      %v730 = vpop.f32.mrb[0].mxu0
      %731 = vmatprep.mubr.f32.mxu0 0.0
      %732 = vmatmul.mubr.f32.gmra.mrb[0].mxu0 %v632
      %v733 = vpop.f32.mrb[0].mxu0
      %v734 = vadd.f32 %v605, %v733
      %v735 = vpop.f32.mrb[0].mxu0
      %736 = vmatprep.mubr.f32.mxu0 0.0
      %737 = vmatmul.mubr.f32.gmra.mrb[0].mxu0 %v635
      %v738 = vpop.f32.mrb[0].mxu0
      %v739 = vadd.f32 %v610, %v738
      %v740 = vpop.f32.mrb[0].mxu0
      %741 = vdwg.mxu0
      %vm742 = vcmp.ge.f32.partialorder %v704, 0.0
      %vm743 = vcmp.ge.f32.partialorder %v709, 0.0
      %vm744 = vcmp.ge.f32.partialorder %v714, 0.0
      %vm745 = vcmp.ge.f32.partialorder %v719, 0.0
      %vm746 = vcmp.ge.f32.partialorder %v724, 0.0
      %vm747 = vcmp.ge.f32.partialorder %v729, 0.0
      %vm748 = vcmp.ge.f32.partialorder %v734, 0.0
      %vm749 = vcmp.ge.f32.partialorder %v739, 0.0
      %v750 = vstv %s554
      %v751 = vmul.f32 %v750, %v704
      %v752 = vmul.f32 %v750, %v709
      %v753 = vmul.f32 %v750, %v714
      %v754 = vmul.f32 %v750, %v719
      %v755 = vmul.f32 %v750, %v724
      %v756 = vmul.f32 %v750, %v729
      %v757 = vmul.f32 %v750, %v734
      %v758 = vmul.f32 %v750, %v739
      %v759 = vsel %vm742, %v704, %v751
      %v760 = vsel %vm743, %v709, %v752
      %v761 = vsel %vm744, %v714, %v753
      %v762 = vsel %vm745, %v719, %v754
      %v763 = vsel %vm746, %v724, %v755
      %v764 = vsel %vm747, %v729, %v756
      %v765 = vsel %vm748, %v734, %v757
      %v766 = vsel %vm749, %v739, %v758
      %v767 = vld [vmem:[%s529] sm:$0xff]
      %768 = vmatprep.subr.mxu0 0.0
      %769 = vmatpush1.msra.mxu0 %v767
      %770 = vmatprep.subr.mxu0 0.0
      %771 = vmatpush1.msra.mxu0 0.0
      %772 = vmatprep.subr.mxu0 0.0
      %773 = vmatpush1.msra.mxu0 0.0
      %774 = vmatprep.subr.mxu0 0.0
      %775 = vmatpush1.msra.mxu0 0.0
      %776 = vmatprep.subr.mxu0 0.0
      %777 = vmatpush1.msra.mxu0 0.0
      %778 = vmatprep.subr.mxu0 0.0
      %779 = vmatpush1.msra.mxu0 0.0
      %780 = vmatprep.subr.mxu0 0.0
      %781 = vmatpush1.msra.mxu0 0.0
      %782 = vmatprep.subr.mxu0 0.0
      %783 = vmatpush1.msra.mxu0 0.0
      %784 = vmatprep.subr.mxu0 0.0
      %785 = vmatpush1.msra.mxu0 0.0
      %786 = vmatprep.subr.mxu0 0.0
      %787 = vmatpush1.msra.mxu0 0.0
      %788 = vmatprep.subr.mxu0 0.0
      %789 = vmatpush1.msra.mxu0 0.0
      %790 = vmatprep.subr.mxu0 0.0
      %791 = vmatpush1.msra.mxu0 0.0
      %792 = vmatprep.subr.mxu0 0.0
      %793 = vmatpush1.msra.mxu0 0.0
      %794 = vmatprep.subr.mxu0 0.0
      %795 = vmatpush1.msra.mxu0 0.0
      %796 = vmatprep.subr.mxu0 0.0
      %797 = vmatpush1.msra.mxu0 0.0
      %798 = vmatprep.subr.mxu0 0.0
      %799 = vmatpush1.msra.mxu0 0.0
      %800 = vmatprep.subr.mxu0 0.0
      %801 = vmatpush1.msra.mxu0 0.0
      %802 = vmatprep.subr.mxu0 0.0
      %803 = vmatpush1.msra.mxu0 0.0
      %804 = vmatprep.subr.mxu0 0.0
      %805 = vmatpush1.msra.mxu0 0.0
      %806 = vmatprep.subr.mxu0 0.0
      %807 = vmatpush1.msra.mxu0 0.0
      %808 = vmatprep.subr.mxu0 0.0
      %809 = vmatpush1.msra.mxu0 0.0
      %810 = vmatprep.subr.mxu0 0.0
      %811 = vmatpush1.msra.mxu0 0.0
      %812 = vmatprep.subr.mxu0 0.0
      %813 = vmatpush1.msra.mxu0 0.0
      %814 = vmatprep.subr.mxu0 0.0
      %815 = vmatpush1.msra.mxu0 0.0
      %816 = vmatprep.subr.mxu0 0.0
      %817 = vmatpush1.msra.mxu0 0.0
      %818 = vmatprep.subr.mxu0 0.0
      %819 = vmatpush1.msra.mxu0 0.0
      %820 = vmatprep.subr.mxu0 0.0
      %821 = vmatpush1.msra.mxu0 0.0
      %822 = vmatprep.subr.mxu0 0.0
      %823 = vmatpush1.msra.mxu0 0.0
      %824 = vmatprep.subr.mxu0 0.0
      %825 = vmatpush1.msra.mxu0 0.0
      %826 = vmatprep.subr.mxu0 0.0
      %827 = vmatpush1.msra.mxu0 0.0
      %828 = vmatprep.subr.mxu0 0.0
      %829 = vmatpush1.msra.mxu0 0.0
      %830 = vmatprep.subr.mxu0 0.0
      %831 = vmatpush1.msra.mxu0 0.0
      %832 = vmatprep.mubr.f32.mxu0 0.0
      %833 = vmatmul.mubr.f32.gmra.mrb[0].mxu0 %v614
      %v834 = vpop.f32.mrb[0].mxu0
      %v835 = vadd.f32 %v575, %v834
      %v836 = vpop.f32.mrb[0].mxu0
      %837 = vmatprep.mubr.f32.mxu0 0.0
      %838 = vmatmul.mubr.f32.gmra.mrb[0].mxu0 %v617
      %v839 = vpop.f32.mrb[0].mxu0
      %v840 = vadd.f32 %v580, %v839
      %v841 = vpop.f32.mrb[0].mxu0
      %842 = vmatprep.mubr.f32.mxu0 0.0
      %843 = vmatmul.mubr.f32.gmra.mrb[0].mxu0 %v620
      %v844 = vpop.f32.mrb[0].mxu0
      %v845 = vadd.f32 %v585, %v844
      %v846 = vpop.f32.mrb[0].mxu0
      %847 = vmatprep.mubr.f32.mxu0 0.0
      %848 = vmatmul.mubr.f32.gmra.mrb[0].mxu0 %v623
      %v849 = vpop.f32.mrb[0].mxu0
      %v850 = vadd.f32 %v590, %v849
      %v851 = vpop.f32.mrb[0].mxu0
      %852 = vmatprep.mubr.f32.mxu0 0.0
      %853 = vmatmul.mubr.f32.gmra.mrb[0].mxu0 %v626
      %v854 = vpop.f32.mrb[0].mxu0
      %v855 = vadd.f32 %v595, %v854
      %v856 = vpop.f32.mrb[0].mxu0
      %857 = vmatprep.mubr.f32.mxu0 0.0
      %858 = vmatmul.mubr.f32.gmra.mrb[0].mxu0 %v629
      %v859 = vpop.f32.mrb[0].mxu0
      %v860 = vadd.f32 %v600, %v859
      %v861 = vpop.f32.mrb[0].mxu0
      %862 = vmatprep.mubr.f32.mxu0 0.0
      %863 = vmatmul.mubr.f32.gmra.mrb[0].mxu0 %v632
      %v864 = vpop.f32.mrb[0].mxu0
      %v865 = vadd.f32 %v605, %v864
      %v866 = vpop.f32.mrb[0].mxu0
      %867 = vmatprep.mubr.f32.mxu0 0.0
      %868 = vmatmul.mubr.f32.gmra.mrb[0].mxu0 %v635
      %v869 = vpop.f32.mrb[0].mxu0
      %v870 = vadd.f32 %v610, %v869
      %v871 = vpop.f32.mrb[0].mxu0
      %872 = vdwg.mxu0
      %vm873 = vcmp.ge.f32.partialorder %v835, 0.0
      %vm874 = vcmp.ge.f32.partialorder %v840, 0.0
      %vm875 = vcmp.ge.f32.partialorder %v845, 0.0
      %vm876 = vcmp.ge.f32.partialorder %v850, 0.0
      %vm877 = vcmp.ge.f32.partialorder %v855, 0.0
      %vm878 = vcmp.ge.f32.partialorder %v860, 0.0
      %vm879 = vcmp.ge.f32.partialorder %v865, 0.0
      %vm880 = vcmp.ge.f32.partialorder %v870, 0.0
      %v881 = vmul.f32 %v750, %v835
      %v882 = vmul.f32 %v750, %v840
      %v883 = vmul.f32 %v750, %v845
      %v884 = vmul.f32 %v750, %v850
      %v885 = vmul.f32 %v750, %v855
      %v886 = vmul.f32 %v750, %v860
      %v887 = vmul.f32 %v750, %v865
      %v888 = vmul.f32 %v750, %v870
      %v889 = vsel %vm873, %v835, %v881
      %v890 = vsel %vm874, %v840, %v882
      %v891 = vsel %vm875, %v845, %v883
      %v892 = vsel %vm876, %v850, %v884
      %v893 = vsel %vm877, %v855, %v885
      %v894 = vsel %vm878, %v860, %v886
      %v895 = vsel %vm879, %v865, %v887
      %v896 = vsel %vm880, %v870, %v888
      %v897 = vld [vmem:[%s543] sm:$0xff]
      %898 = vmatprep.subr.mxu0 0.0
      %899 = vmatpush1.msra.mxu0 %v897
      %900 = vmatprep.subr.mxu0 0.0
      %901 = vmatpush1.msra.mxu0 0.0
      %902 = vmatprep.subr.mxu0 0.0
      %903 = vmatpush1.msra.mxu0 0.0
      %904 = vmatprep.subr.mxu0 0.0
      %905 = vmatpush1.msra.mxu0 0.0
      %906 = vmatprep.subr.mxu0 0.0
      %907 = vmatpush1.msra.mxu0 0.0
      %908 = vmatprep.subr.mxu0 0.0
      %909 = vmatpush1.msra.mxu0 0.0
      %910 = vmatprep.subr.mxu0 0.0
      %911 = vmatpush1.msra.mxu0 0.0
      %912 = vmatprep.subr.mxu0 0.0
      %913 = vmatpush1.msra.mxu0 0.0
      %914 = vmatprep.subr.mxu0 0.0
      %915 = vmatpush1.msra.mxu0 0.0
      %916 = vmatprep.subr.mxu0 0.0
      %917 = vmatpush1.msra.mxu0 0.0
      %918 = vmatprep.subr.mxu0 0.0
      %919 = vmatpush1.msra.mxu0 0.0
      %920 = vmatprep.subr.mxu0 0.0
      %921 = vmatpush1.msra.mxu0 0.0
      %922 = vmatprep.subr.mxu0 0.0
      %923 = vmatpush1.msra.mxu0 0.0
      %924 = vmatprep.subr.mxu0 0.0
      %925 = vmatpush1.msra.mxu0 0.0
      %926 = vmatprep.subr.mxu0 0.0
      %927 = vmatpush1.msra.mxu0 0.0
      %928 = vmatprep.subr.mxu0 0.0
      %929 = vmatpush1.msra.mxu0 0.0
      %930 = vmatprep.subr.mxu0 0.0
      %931 = vmatpush1.msra.mxu0 0.0
      %932 = vmatprep.subr.mxu0 0.0
      %933 = vmatpush1.msra.mxu0 0.0
      %934 = vmatprep.subr.mxu0 0.0
      %935 = vmatpush1.msra.mxu0 0.0
      %936 = vmatprep.subr.mxu0 0.0
      %937 = vmatpush1.msra.mxu0 0.0
      %938 = vmatprep.subr.mxu0 0.0
      %939 = vmatpush1.msra.mxu0 0.0
      %940 = vmatprep.subr.mxu0 0.0
      %941 = vmatpush1.msra.mxu0 0.0
      %942 = vmatprep.subr.mxu0 0.0
      %943 = vmatpush1.msra.mxu0 0.0
      %944 = vmatprep.subr.mxu0 0.0
      %945 = vmatpush1.msra.mxu0 0.0
      %946 = vmatprep.subr.mxu0 0.0
      %947 = vmatpush1.msra.mxu0 0.0
      %948 = vmatprep.subr.mxu0 0.0
      %949 = vmatpush1.msra.mxu0 0.0
      %950 = vmatprep.subr.mxu0 0.0
      %951 = vmatpush1.msra.mxu0 0.0
      %952 = vmatprep.subr.mxu0 0.0
      %953 = vmatpush1.msra.mxu0 0.0
      %954 = vmatprep.subr.mxu0 0.0
      %955 = vmatpush1.msra.mxu0 0.0
      %956 = vmatprep.subr.mxu0 0.0
      %957 = vmatpush1.msra.mxu0 0.0
      %958 = vmatprep.subr.mxu0 0.0
      %959 = vmatpush1.msra.mxu0 0.0
      %960 = vmatprep.subr.mxu0 0.0
      %961 = vmatpush1.msra.mxu0 0.0
      %962 = vmatprep.mubr.f32.mxu0 0.0
      %963 = vmatmul.mubr.f32.gmra.mrb[0].mxu0 %v614
      %v964 = vpop.f32.mrb[0].mxu0
      %v965 = vadd.f32 %v575, %v964
      %v966 = vpop.f32.mrb[0].mxu0
      %967 = vmatprep.mubr.f32.mxu0 0.0
      %968 = vmatmul.mubr.f32.gmra.mrb[0].mxu0 %v617
      %v969 = vpop.f32.mrb[0].mxu0
      %v970 = vadd.f32 %v580, %v969
      %v971 = vpop.f32.mrb[0].mxu0
      %972 = vmatprep.mubr.f32.mxu0 0.0
      %973 = vmatmul.mubr.f32.gmra.mrb[0].mxu0 %v620
      %v974 = vpop.f32.mrb[0].mxu0
      %v975 = vadd.f32 %v585, %v974
      %v976 = vpop.f32.mrb[0].mxu0
      %977 = vmatprep.mubr.f32.mxu0 0.0
      %978 = vmatmul.mubr.f32.gmra.mrb[0].mxu0 %v623
      %v979 = vpop.f32.mrb[0].mxu0
      %v980 = vadd.f32 %v590, %v979
      %v981 = vpop.f32.mrb[0].mxu0
      %982 = vmatprep.mubr.f32.mxu0 0.0
      %983 = vmatmul.mubr.f32.gmra.mrb[0].mxu0 %v626
      %v984 = vpop.f32.mrb[0].mxu0
      %v985 = vadd.f32 %v595, %v984
      %v986 = vpop.f32.mrb[0].mxu0
      %987 = vmatprep.mubr.f32.mxu0 0.0
      %988 = vmatmul.mubr.f32.gmra.mrb[0].mxu0 %v629
      %v989 = vpop.f32.mrb[0].mxu0
      %v990 = vadd.f32 %v600, %v989
      %v991 = vpop.f32.mrb[0].mxu0
      %992 = vmatprep.mubr.f32.mxu0 0.0
      %993 = vmatmul.mubr.f32.gmra.mrb[0].mxu0 %v632
      %v994 = vpop.f32.mrb[0].mxu0
      %v995 = vadd.f32 %v605, %v994
      %v996 = vpop.f32.mrb[0].mxu0
      %997 = vmatprep.mubr.f32.mxu0 0.0
      %998 = vmatmul.mubr.f32.gmra.mrb[0].mxu0 %v635
      %v999 = vpop.f32.mrb[0].mxu0
      %v1000 = vadd.f32 %v610, %v999
      %v1001 = vpop.f32.mrb[0].mxu0
      %1002 = vdwg.mxu0
      %vm1003 = vcmp.ge.f32.partialorder %v965, 0.0
      %vm1004 = vcmp.ge.f32.partialorder %v970, 0.0
      %vm1005 = vcmp.ge.f32.partialorder %v975, 0.0
      %vm1006 = vcmp.ge.f32.partialorder %v980, 0.0
      %vm1007 = vcmp.ge.f32.partialorder %v985, 0.0
      %vm1008 = vcmp.ge.f32.partialorder %v990, 0.0
      %vm1009 = vcmp.ge.f32.partialorder %v995, 0.0
      %vm1010 = vcmp.ge.f32.partialorder %v1000, 0.0
      %v1011 = vmul.f32 %v750, %v965
      %v1012 = vmul.f32 %v750, %v970
      %v1013 = vmul.f32 %v750, %v975
      %v1014 = vmul.f32 %v750, %v980
      %v1015 = vmul.f32 %v750, %v985
      %v1016 = vmul.f32 %v750, %v990
      %v1017 = vmul.f32 %v750, %v995
      %v1018 = vmul.f32 %v750, %v1000
      %v1019 = vsel %vm1003, %v965, %v1011
      %v1020 = vsel %vm1004, %v970, %v1012
      %v1021 = vsel %vm1005, %v975, %v1013
      %v1022 = vsel %vm1006, %v980, %v1014
      %v1023 = vsel %vm1007, %v985, %v1015
      %v1024 = vsel %vm1008, %v990, %v1016
      %v1025 = vsel %vm1009, %v995, %v1017
      %v1026 = vsel %vm1010, %v1000, %v1018
      %v1027 = vlaneseq
      %v1028 = vand.u32 %v1027, 127
      %v1029 = vld [vmem:[%s549] sm:$0x1]
      %1030 = vrot.lane.b32.xlu0 %v889, 1
      %v1031 = vpop.permute.xlu0 %1030
      %1032 = vrot.lane.b32.xlu0 %v890, 1
      %v1033 = vpop.permute.xlu0 %1032
      %1034 = vrot.lane.b32.xlu0 %v891, 1
      %v1035 = vpop.permute.xlu0 %1034
      %1036 = vrot.lane.b32.xlu0 %v892, 1
      %v1037 = vpop.permute.xlu0 %1036
      %1038 = vrot.lane.b32.xlu0 %v893, 1
      %v1039 = vpop.permute.xlu0 %1038
      %1040 = vrot.lane.b32.xlu0 %v894, 1
      %v1041 = vpop.permute.xlu0 %1040
      %1042 = vrot.lane.b32.xlu0 %v895, 1
      %v1043 = vpop.permute.xlu0 %1042
      %1044 = vrot.lane.b32.xlu0 %v896, 1
      %v1045 = vpop.permute.xlu0 %1044
      %vm1046 = vcmp.lt.s32.totalorder %v1028, 1
      %1047 = vrot.lane.b32.xlu0 %v759, 1
      %v1048 = vpop.permute.xlu0 %1047
      %1049 = vrot.lane.b32.xlu0 %v760, 1
      %v1050 = vpop.permute.xlu0 %1049
      %1051 = vrot.lane.b32.xlu0 %v761, 1
      %v1052 = vpop.permute.xlu0 %1051
      %1053 = vrot.lane.b32.xlu0 %v762, 1
      %v1054 = vpop.permute.xlu0 %1053
      %1055 = vrot.lane.b32.xlu0 %v763, 1
      %v1056 = vpop.permute.xlu0 %1055
      %1057 = vrot.lane.b32.xlu0 %v764, 1
      %v1058 = vpop.permute.xlu0 %1057
      %1059 = vrot.lane.b32.xlu0 %v765, 1
      %v1060 = vpop.permute.xlu0 %1059
      %1061 = vrot.lane.b32.xlu0 %v766, 1
      %v1062 = vpop.permute.xlu0 %1061
      %v1063 = vsel %vm1046, 1, 0
      %vm1064 = vcmp.eq.s32.totalorder %v1063, 1
      %v1065 = vsel %vm1064, %v1031, %v1048
      %v1066 = vsel %vm1064, %v1033, %v1050
      %v1067 = vsel %vm1064, %v1035, %v1052
      %v1068 = vsel %vm1064, %v1037, %v1054
      %v1069 = vsel %vm1064, %v1039, %v1056
      %v1070 = vsel %vm1064, %v1041, %v1058
      %v1071 = vsel %vm1064, %v1043, %v1060
      %v1072 = vsel %vm1064, %v1045, %v1062
      %vm1073 = vcmp.lt.s32.totalorder %v1029, 1
      %v1074 = vsel %vm1073, 1, 0
      %v1075 = vlaneseq
      %v1076 = vshrl.u32 %v1075, 7
      %v1077 = vsub.s32 0, %v1076
      %v1078 = vrot.slane %v1074, %v1077
      %vm1079 = vcmp.eq.s32.totalorder %v1078, 1
      %v1080 = vsel %vm1079, 0.0, %v1065
      %v1081 = vsel %vm1079, 0.0, %v1066
      %v1082 = vsel %vm1079, 0.0, %v1067
      %v1083 = vsel %vm1079, 0.0, %v1068
      %v1084 = vsel %vm1079, 0.0, %v1069
      %v1085 = vsel %vm1079, 0.0, %v1070
      %v1086 = vsel %vm1079, 0.0, %v1071
      %v1087 = vsel %vm1079, 0.0, %v1072
      %1088 = vrot.lane.b32.xlu0 %v1019, 127
      %v1089 = vpop.permute.xlu0 %1088
      %1090 = vrot.lane.b32.xlu0 %v1020, 127
      %v1091 = vpop.permute.xlu0 %1090
      %1092 = vrot.lane.b32.xlu0 %v1021, 127
      %v1093 = vpop.permute.xlu0 %1092
      %1094 = vrot.lane.b32.xlu0 %v1022, 127
      %v1095 = vpop.permute.xlu0 %1094
      %1096 = vrot.lane.b32.xlu0 %v1023, 127
      %v1097 = vpop.permute.xlu0 %1096
      %1098 = vrot.lane.b32.xlu0 %v1024, 127
      %v1099 = vpop.permute.xlu0 %1098
      %1100 = vrot.lane.b32.xlu0 %v1025, 127
      %v1101 = vpop.permute.xlu0 %1100
      %1102 = vrot.lane.b32.xlu0 %v1026, 127
      %v1103 = vpop.permute.xlu0 %1102
      %vm1104 = vcmp.ge.s32.totalorder %v1028, 127
      %1105 = vrot.lane.b32.xlu0 %v759, 127
      %v1106 = vpop.permute.xlu0 %1105
      %1107 = vrot.lane.b32.xlu0 %v760, 127
      %v1108 = vpop.permute.xlu0 %1107
      %1109 = vrot.lane.b32.xlu0 %v761, 127
      %v1110 = vpop.permute.xlu0 %1109
      %1111 = vrot.lane.b32.xlu0 %v762, 127
      %v1112 = vpop.permute.xlu0 %1111
      %1113 = vrot.lane.b32.xlu0 %v763, 127
      %v1114 = vpop.permute.xlu0 %1113
      %1115 = vrot.lane.b32.xlu0 %v764, 127
      %v1116 = vpop.permute.xlu0 %1115
      %1117 = vrot.lane.b32.xlu0 %v765, 127
      %v1118 = vpop.permute.xlu0 %1117
      %1119 = vrot.lane.b32.xlu0 %v766, 127
      %v1120 = vpop.permute.xlu0 %1119
      %v1121 = vsel %vm1104, 1, 0
      %vm1122 = vcmp.eq.s32.totalorder %v1121, 1
      %v1123 = vsel %vm1122, %v1089, %v1106
      %v1124 = vsel %vm1122, %v1091, %v1108
      %v1125 = vsel %vm1122, %v1093, %v1110
      %v1126 = vsel %vm1122, %v1095, %v1112
      %v1127 = vsel %vm1122, %v1097, %v1114
      %v1128 = vsel %vm1122, %v1099, %v1116
      %v1129 = vsel %vm1122, %v1101, %v1118
      %v1130 = vsel %vm1122, %v1103, %v1120
      %vm1131 = vcmp.ge.s32.totalorder %v1029, 191
      %v1132 = vsel %vm1131, 1, 0
      %v1133 = vlaneseq
      %v1134 = vshrl.u32 %v1133, 7
      %v1135 = vsub.s32 0, %v1134
      %v1136 = vrot.slane %v1132, %v1135
      %vm1137 = vcmp.eq.s32.totalorder %v1136, 1
      %v1138 = vsel %vm1137, 0.0, %v1123
      %v1139 = vsel %vm1137, 0.0, %v1124
      %v1140 = vsel %vm1137, 0.0, %v1125
      %v1141 = vsel %vm1137, 0.0, %v1126
      %v1142 = vsel %vm1137, 0.0, %v1127
      %v1143 = vsel %vm1137, 0.0, %v1128
      %v1144 = vsel %vm1137, 0.0, %v1129
      %v1145 = vsel %vm1137, 0.0, %v1130
      %v1146 = vld [vmem:[%s7] sm:$0xff]
      %v1147 = vld [vmem:[%s7 + $0x8] sm:$0xff]
      %v1148 = vld [vmem:[%s7 + $0x10] sm:$0xff]
      %v1149 = vld [vmem:[%s7 + $0x18] sm:$0xff]
      %v1150 = vld [vmem:[%s7 + $0x20] sm:$0xff]
      %v1151 = vld [vmem:[%s7 + $0x28] sm:$0xff]
      %v1152 = vld [vmem:[%s7 + $0x30] sm:$0xff]
      %v1153 = vld [vmem:[%s7 + $0x38] sm:$0xff]
      %v1154 = vld [vmem:[%s7 + $0x40] sm:$0xff]
      %v1155 = vld [vmem:[%s7 + $0x48] sm:$0xff]
      %v1156 = vld [vmem:[%s7 + $0x50] sm:$0xff]
      %v1157 = vld [vmem:[%s7 + $0x58] sm:$0xff]
      %v1158 = vld [vmem:[%s7 + $0x60] sm:$0xff]
      %v1159 = vld [vmem:[%s7 + $0x68] sm:$0xff]
      %v1160 = vld [vmem:[%s7 + $0x70] sm:$0xff]
      %v1161 = vld [vmem:[%s7 + $0x78] sm:$0xff]
      %v1162 = vld [vmem:[%s7 + $0x80] sm:$0xff]
      %v1163 = vld [vmem:[%s7 + $0x88] sm:$0xff]
      %v1164 = vld [vmem:[%s7 + $0x90] sm:$0xff]
      %v1165 = vld [vmem:[%s7 + $0x98] sm:$0xff]
      %v1166 = vld [vmem:[%s7 + $0xa0] sm:$0xff]
      %v1167 = vld [vmem:[%s7 + $0xa8] sm:$0xff]
      %v1168 = vld [vmem:[%s7 + $0xb0] sm:$0xff]
      %v1169 = vld [vmem:[%s7 + $0xb8] sm:$0xff]
      %v1170 = vld [vmem:[%s7 + $0xc0] sm:$0xff]
      %v1171 = vld [vmem:[%s7 + $0xc8] sm:$0xff]
      %v1172 = vld [vmem:[%s7 + $0xd0] sm:$0xff]
      %v1173 = vld [vmem:[%s7 + $0xd8] sm:$0xff]
      %v1174 = vld [vmem:[%s7 + $0xe0] sm:$0xff]
      %v1175 = vld [vmem:[%s7 + $0xe8] sm:$0xff]
      %v1176 = vld [vmem:[%s7 + $0xf0] sm:$0xff]
      %v1177 = vld [vmem:[%s7 + $0xf8] sm:$0xff]
      %v1178 = vld [vmem:[%s8] sm:$0xff]
      %v1179 = vld [vmem:[%s8 + $0x8] sm:$0xff]
      %v1180 = vld [vmem:[%s8 + $0x10] sm:$0xff]
      %v1181 = vld [vmem:[%s8 + $0x18] sm:$0xff]
      %v1182 = vld [vmem:[%s8 + $0x20] sm:$0xff]
      %v1183 = vld [vmem:[%s8 + $0x28] sm:$0xff]
      %v1184 = vld [vmem:[%s8 + $0x30] sm:$0xff]
      %v1185 = vld [vmem:[%s8 + $0x38] sm:$0xff]
      %v1186 = vld [vmem:[%s8 + $0x40] sm:$0xff]
      %v1187 = vld [vmem:[%s8 + $0x48] sm:$0xff]
      %v1188 = vld [vmem:[%s8 + $0x50] sm:$0xff]
      %v1189 = vld [vmem:[%s8 + $0x58] sm:$0xff]
      %v1190 = vld [vmem:[%s8 + $0x60] sm:$0xff]
      %v1191 = vld [vmem:[%s8 + $0x68] sm:$0xff]
      %v1192 = vld [vmem:[%s8 + $0x70] sm:$0xff]
      %v1193 = vld [vmem:[%s8 + $0x78] sm:$0xff]
      %1195 = vset.pattern.permute.xlu0 0
      %1196 = vperm.xlu0 %1195, %v1178
      %v1197 = vpop.permute.xlu0 %1196
      %1200 = vset.pattern.permute.xlu0 0
      %1201 = vperm.xlu0 %1200, %v1179
      %v1202 = vpop.permute.xlu0 %1201
      %1205 = vset.pattern.permute.xlu0 0
      %1206 = vperm.xlu0 %1205, %v1180
      %v1207 = vpop.permute.xlu0 %1206
      %1210 = vset.pattern.permute.xlu0 0
      %1211 = vperm.xlu0 %1210, %v1181
      %v1212 = vpop.permute.xlu0 %1211
      %1215 = vset.pattern.permute.xlu0 0
      %1216 = vperm.xlu0 %1215, %v1182
      %v1217 = vpop.permute.xlu0 %1216
      %1220 = vset.pattern.permute.xlu0 0
      %1221 = vperm.xlu0 %1220, %v1183
      %v1222 = vpop.permute.xlu0 %1221
      %1225 = vset.pattern.permute.xlu0 0
      %1226 = vperm.xlu0 %1225, %v1184
      %v1227 = vpop.permute.xlu0 %1226
      %1230 = vset.pattern.permute.xlu0 0
      %1231 = vperm.xlu0 %1230, %v1185
      %v1232 = vpop.permute.xlu0 %1231
      %1235 = vset.pattern.permute.xlu0 0
      %1236 = vperm.xlu0 %1235, %v1186
      %v1237 = vpop.permute.xlu0 %1236
      %1240 = vset.pattern.permute.xlu0 0
      %1241 = vperm.xlu0 %1240, %v1187
      %v1242 = vpop.permute.xlu0 %1241
      %1245 = vset.pattern.permute.xlu0 0
      %1246 = vperm.xlu0 %1245, %v1188
      %v1247 = vpop.permute.xlu0 %1246
      %1250 = vset.pattern.permute.xlu0 0
      %1251 = vperm.xlu0 %1250, %v1189
      %v1252 = vpop.permute.xlu0 %1251
      %1255 = vset.pattern.permute.xlu0 0
      %1256 = vperm.xlu0 %1255, %v1190
      %v1257 = vpop.permute.xlu0 %1256
      %1260 = vset.pattern.permute.xlu0 0
      %1261 = vperm.xlu0 %1260, %v1191
      %v1262 = vpop.permute.xlu0 %1261
      %1265 = vset.pattern.permute.xlu0 0
      %1266 = vperm.xlu0 %1265, %v1192
      %v1267 = vpop.permute.xlu0 %1266
      %1270 = vset.pattern.permute.xlu0 0
      %1271 = vperm.xlu0 %1270, %v1193
      %v1272 = vpop.permute.xlu0 %1271
      %vm1274 = vcmask 523264
      %v1276 = vsel %vm1274, %v1147, 0
      %v1279 = vsel %vm1274, %v1149, 0
      %v1282 = vsel %vm1274, %v1151, 0
      %v1285 = vsel %vm1274, %v1153, 0
      %v1288 = vsel %vm1274, %v1155, 0
      %v1291 = vsel %vm1274, %v1157, 0
      %v1294 = vsel %vm1274, %v1159, 0
      %v1297 = vsel %vm1274, %v1161, 0
      %v1300 = vsel %vm1274, %v1163, 0
      %v1303 = vsel %vm1274, %v1165, 0
      %v1306 = vsel %vm1274, %v1167, 0
      %v1309 = vsel %vm1274, %v1169, 0
      %v1312 = vsel %vm1274, %v1171, 0
      %v1315 = vsel %vm1274, %v1173, 0
      %v1318 = vsel %vm1274, %v1175, 0
      %v1321 = vsel %vm1274, %v1177, 0
      %1323 = vmatprep.subr.mxu0 0.0
      %1324 = vmatpush1.msra.mxu0 %v1080
      %1325 = vmatprep.subr.mxu0 0.0
      %1326 = vmatpush1.msra.mxu0 %v1081
      %1327 = vmatprep.subr.mxu0 0.0
      %1328 = vmatpush1.msra.mxu0 %v1082
      %1329 = vmatprep.subr.mxu0 0.0
      %1330 = vmatpush1.msra.mxu0 %v1083
      %1331 = vmatprep.subr.mxu0 0.0
      %1332 = vmatpush1.msra.mxu0 %v1084
      %1333 = vmatprep.subr.mxu0 0.0
      %1334 = vmatpush1.msra.mxu0 %v1085
      %1335 = vmatprep.subr.mxu0 0.0
      %1336 = vmatpush1.msra.mxu0 %v1086
      %1337 = vmatprep.subr.mxu0 0.0
      %1338 = vmatpush1.msra.mxu0 %v1087
      %1339 = vmatprep.subr.mxu0 0.0
      %1340 = vmatpush1.msra.mxu0 %v759
      %1341 = vmatprep.subr.mxu0 0.0
      %1342 = vmatpush1.msra.mxu0 %v760
      %1343 = vmatprep.subr.mxu0 0.0
      %1344 = vmatpush1.msra.mxu0 %v761
      %1345 = vmatprep.subr.mxu0 0.0
      %1346 = vmatpush1.msra.mxu0 %v762
      %1347 = vmatprep.subr.mxu0 0.0
      %1348 = vmatpush1.msra.mxu0 %v763
      %1349 = vmatprep.subr.mxu0 0.0
      %1350 = vmatpush1.msra.mxu0 %v764
      %1351 = vmatprep.subr.mxu0 0.0
      %1352 = vmatpush1.msra.mxu0 %v765
      %1353 = vmatprep.subr.mxu0 0.0
      %1354 = vmatpush1.msra.mxu0 %v766
      %1355 = vmatprep.subr.mxu0 0.0
      %1356 = vmatpush1.msra.mxu0 %v1138
      %1357 = vmatprep.subr.mxu0 0.0
      %1358 = vmatpush1.msra.mxu0 %v1139
      %1359 = vmatprep.subr.mxu0 0.0
      %1360 = vmatpush1.msra.mxu0 %v1140
      %1361 = vmatprep.subr.mxu0 0.0
      %1362 = vmatpush1.msra.mxu0 %v1141
      %1363 = vmatprep.subr.mxu0 0.0
      %1364 = vmatpush1.msra.mxu0 %v1142
      %1365 = vmatprep.subr.mxu0 0.0
      %1366 = vmatpush1.msra.mxu0 %v1143
      %1367 = vmatprep.subr.mxu0 0.0
      %1368 = vmatpush1.msra.mxu0 %v1144
      %1369 = vmatprep.subr.mxu0 0.0
      %1370 = vmatpush1.msra.mxu0 %v1145
      %1371 = vmatprep.subr.mxu0 0.0
      %1372 = vmatpush1.msra.mxu0 0.0
      %1373 = vmatprep.subr.mxu0 0.0
      %1374 = vmatpush1.msra.mxu0 0.0
      %1375 = vmatprep.subr.mxu0 0.0
      %1376 = vmatpush1.msra.mxu0 0.0
      %1377 = vmatprep.subr.mxu0 0.0
      %1378 = vmatpush1.msra.mxu0 0.0
      %1379 = vmatprep.subr.mxu0 0.0
      %1380 = vmatpush1.msra.mxu0 0.0
      %1381 = vmatprep.subr.mxu0 0.0
      %1382 = vmatpush1.msra.mxu0 0.0
      %1383 = vmatprep.subr.mxu0 0.0
      %1384 = vmatpush1.msra.mxu0 0.0
      %1385 = vmatprep.subr.mxu0 0.0
      %1386 = vmatpush1.msra.mxu0 0.0
      %1387 = vmatprep.mubr.f32.mxu0 %v1276
      %1388 = vmatmul.mubr.f32.gmra.mrb[0].mxu0 %v1146
      %v1389 = vpop.f32.mrb[0].mxu0
      %v1390 = vadd.f32 %v1197, %v1389
      %v1391 = vpop.f32.mrb[0].mxu0
      %1392 = vmatprep.mubr.f32.mxu0 %v1279
      %1393 = vmatmul.mubr.f32.gmra.mrb[0].mxu0 %v1148
      %v1394 = vpop.f32.mrb[0].mxu0
      %v1395 = vadd.f32 %v1202, %v1394
      %v1396 = vpop.f32.mrb[0].mxu0
      %1397 = vmatprep.mubr.f32.mxu0 %v1282
      %1398 = vmatmul.mubr.f32.gmra.mrb[0].mxu0 %v1150
      %v1399 = vpop.f32.mrb[0].mxu0
      %v1400 = vadd.f32 %v1207, %v1399
      %v1401 = vpop.f32.mrb[0].mxu0
      %1402 = vmatprep.mubr.f32.mxu0 %v1285
      %1403 = vmatmul.mubr.f32.gmra.mrb[0].mxu0 %v1152
      %v1404 = vpop.f32.mrb[0].mxu0
      %v1405 = vadd.f32 %v1212, %v1404
      %v1406 = vpop.f32.mrb[0].mxu0
      %1407 = vmatprep.mubr.f32.mxu0 %v1288
      %1408 = vmatmul.mubr.f32.gmra.mrb[0].mxu0 %v1154
      %v1409 = vpop.f32.mrb[0].mxu0
      %v1410 = vadd.f32 %v1217, %v1409
      %v1411 = vpop.f32.mrb[0].mxu0
      %1412 = vmatprep.mubr.f32.mxu0 %v1291
      %1413 = vmatmul.mubr.f32.gmra.mrb[0].mxu0 %v1156
      %v1414 = vpop.f32.mrb[0].mxu0
      %v1415 = vadd.f32 %v1222, %v1414
      %v1416 = vpop.f32.mrb[0].mxu0
      %1417 = vmatprep.mubr.f32.mxu0 %v1294
      %1418 = vmatmul.mubr.f32.gmra.mrb[0].mxu0 %v1158
      %v1419 = vpop.f32.mrb[0].mxu0
      %v1420 = vadd.f32 %v1227, %v1419
      %v1421 = vpop.f32.mrb[0].mxu0
      %1422 = vmatprep.mubr.f32.mxu0 %v1297
      %1423 = vmatmul.mubr.f32.gmra.mrb[0].mxu0 %v1160
      %v1424 = vpop.f32.mrb[0].mxu0
      %v1425 = vadd.f32 %v1232, %v1424
      %v1426 = vpop.f32.mrb[0].mxu0
      %1427 = vmatprep.mubr.f32.mxu0 %v1300
      %1428 = vmatmul.mubr.f32.gmra.mrb[0].mxu0 %v1162
      %v1429 = vpop.f32.mrb[0].mxu0
      %v1430 = vadd.f32 %v1237, %v1429
      %v1431 = vpop.f32.mrb[0].mxu0
      %1432 = vmatprep.mubr.f32.mxu0 %v1303
      %1433 = vmatmul.mubr.f32.gmra.mrb[0].mxu0 %v1164
      %v1434 = vpop.f32.mrb[0].mxu0
      %v1435 = vadd.f32 %v1242, %v1434
      %v1436 = vpop.f32.mrb[0].mxu0
      %1437 = vmatprep.mubr.f32.mxu0 %v1306
      %1438 = vmatmul.mubr.f32.gmra.mrb[0].mxu0 %v1166
      %v1439 = vpop.f32.mrb[0].mxu0
      %v1440 = vadd.f32 %v1247, %v1439
      %v1441 = vpop.f32.mrb[0].mxu0
      %1442 = vmatprep.mubr.f32.mxu0 %v1309
      %1443 = vmatmul.mubr.f32.gmra.mrb[0].mxu0 %v1168
      %v1444 = vpop.f32.mrb[0].mxu0
      %v1445 = vadd.f32 %v1252, %v1444
      %v1446 = vpop.f32.mrb[0].mxu0
      %1447 = vmatprep.mubr.f32.mxu0 %v1312
      %1448 = vmatmul.mubr.f32.gmra.mrb[0].mxu0 %v1170
      %v1449 = vpop.f32.mrb[0].mxu0
      %v1450 = vadd.f32 %v1257, %v1449
      %v1451 = vpop.f32.mrb[0].mxu0
      %1452 = vmatprep.mubr.f32.mxu0 %v1315
      %1453 = vmatmul.mubr.f32.gmra.mrb[0].mxu0 %v1172
      %v1454 = vpop.f32.mrb[0].mxu0
      %v1455 = vadd.f32 %v1262, %v1454
      %v1456 = vpop.f32.mrb[0].mxu0
      %1457 = vmatprep.mubr.f32.mxu0 %v1318
      %1458 = vmatmul.mubr.f32.gmra.mrb[0].mxu0 %v1174
      %v1459 = vpop.f32.mrb[0].mxu0
      %v1460 = vadd.f32 %v1267, %v1459
      %v1461 = vpop.f32.mrb[0].mxu0
      %1462 = vmatprep.mubr.f32.mxu0 %v1321
      %1463 = vmatmul.mubr.f32.gmra.mrb[0].mxu0 %v1176
      %v1464 = vpop.f32.mrb[0].mxu0
      %v1465 = vadd.f32 %v1272, %v1464
      %v1466 = vpop.f32.mrb[0].mxu0
      %1467 = vdwg.mxu0
      %v1468 = vxor.u32 %v1430, 2147483648
      %v1469 = vxor.u32 %v1435, 2147483648
      %v1470 = vxor.u32 %v1440, 2147483648
      %v1471 = vxor.u32 %v1445, 2147483648
      %v1472 = vxor.u32 %v1450, 2147483648
      %v1473 = vxor.u32 %v1455, 2147483648
      %v1474 = vxor.u32 %v1460, 2147483648
      %v1475 = vxor.u32 %v1465, 2147483648
      %v1476 = vmul.f32 %v1468, 1.442695
      %v1477 = vpow.pop %v1476
      %v1478 = vmul.f32 %v1469, 1.442695
      %v1479 = vpow.pop %v1478
      %v1480 = vmul.f32 %v1470, 1.442695
      %v1481 = vpow.pop %v1480
      %v1482 = vmul.f32 %v1471, 1.442695
      %v1483 = vpow.pop %v1482
      %v1484 = vmul.f32 %v1472, 1.442695
      %v1485 = vpow.pop %v1484
      %v1486 = vmul.f32 %v1473, 1.442695
      %v1487 = vpow.pop %v1486
      %v1488 = vmul.f32 %v1474, 1.442695
      %v1489 = vpow.pop %v1488
      %v1490 = vmul.f32 %v1475, 1.442695
      %v1491 = vpow.pop %v1490
      %v1492 = vadd.f32 %v1477, 1.0
      %v1493 = vadd.f32 %v1479, 1.0
      %v1494 = vadd.f32 %v1481, 1.0
      %v1495 = vadd.f32 %v1483, 1.0
      %v1496 = vadd.f32 %v1485, 1.0
      %v1497 = vadd.f32 %v1487, 1.0
      %v1498 = vadd.f32 %v1489, 1.0
      %v1499 = vadd.f32 %v1491, 1.0
      %v1500 = vrcp.pop %v1492
      %v1501 = vmul.f32 1.0, %v1500
      %v1502 = vrcp.pop %v1493
      %v1503 = vmul.f32 1.0, %v1502
      %v1504 = vrcp.pop %v1494
      %v1505 = vmul.f32 1.0, %v1504
      %v1506 = vrcp.pop %v1495
      %v1507 = vmul.f32 1.0, %v1506
      %v1508 = vrcp.pop %v1496
      %v1509 = vmul.f32 1.0, %v1508
      %v1510 = vrcp.pop %v1497
      %v1511 = vmul.f32 1.0, %v1510
      %v1512 = vrcp.pop %v1498
      %v1513 = vmul.f32 1.0, %v1512
      %v1514 = vrcp.pop %v1499
      %v1515 = vmul.f32 1.0, %v1514
      %v1516 = vmul.f32 %v1390, %v1501
      %v1517 = vmul.f32 %v1395, %v1503
      %v1518 = vmul.f32 %v1400, %v1505
      %v1519 = vmul.f32 %v1405, %v1507
      %v1520 = vmul.f32 %v1410, %v1509
      %v1521 = vmul.f32 %v1415, %v1511
      %v1522 = vmul.f32 %v1420, %v1513
      %v1523 = vmul.f32 %v1425, %v1515
      %1524 = vrot.lane.b32.xlu0 %v889, 5
      %v1525 = vpop.permute.xlu0 %1524
      %1526 = vrot.lane.b32.xlu0 %v890, 5
      %v1527 = vpop.permute.xlu0 %1526
      %1528 = vrot.lane.b32.xlu0 %v891, 5
      %v1529 = vpop.permute.xlu0 %1528
      %1530 = vrot.lane.b32.xlu0 %v892, 5
      %v1531 = vpop.permute.xlu0 %1530
      %1532 = vrot.lane.b32.xlu0 %v893, 5
      %v1533 = vpop.permute.xlu0 %1532
      %1534 = vrot.lane.b32.xlu0 %v894, 5
      %v1535 = vpop.permute.xlu0 %1534
      %1536 = vrot.lane.b32.xlu0 %v895, 5
      %v1537 = vpop.permute.xlu0 %1536
      %1538 = vrot.lane.b32.xlu0 %v896, 5
      %v1539 = vpop.permute.xlu0 %1538
      %vm1540 = vcmp.lt.s32.totalorder %v1028, 5
      %1541 = vrot.lane.b32.xlu0 %v759, 5
      %v1542 = vpop.permute.xlu0 %1541
      %1543 = vrot.lane.b32.xlu0 %v760, 5
      %v1544 = vpop.permute.xlu0 %1543
      %1545 = vrot.lane.b32.xlu0 %v761, 5
      %v1546 = vpop.permute.xlu0 %1545
      %1547 = vrot.lane.b32.xlu0 %v762, 5
      %v1548 = vpop.permute.xlu0 %1547
      %1549 = vrot.lane.b32.xlu0 %v763, 5
      %v1550 = vpop.permute.xlu0 %1549
      %1551 = vrot.lane.b32.xlu0 %v764, 5
      %v1552 = vpop.permute.xlu0 %1551
      %1553 = vrot.lane.b32.xlu0 %v765, 5
      %v1554 = vpop.permute.xlu0 %1553
      %1555 = vrot.lane.b32.xlu0 %v766, 5
      %v1556 = vpop.permute.xlu0 %1555
      %v1557 = vsel %vm1540, 1, 0
      %vm1558 = vcmp.eq.s32.totalorder %v1557, 1
      %v1559 = vsel %vm1558, %v1525, %v1542
      %v1560 = vsel %vm1558, %v1527, %v1544
      %v1561 = vsel %vm1558, %v1529, %v1546
      %v1562 = vsel %vm1558, %v1531, %v1548
      %v1563 = vsel %vm1558, %v1533, %v1550
      %v1564 = vsel %vm1558, %v1535, %v1552
      %v1565 = vsel %vm1558, %v1537, %v1554
      %v1566 = vsel %vm1558, %v1539, %v1556
      %vm1567 = vcmp.lt.s32.totalorder %v1029, 5
      %v1568 = vsel %vm1567, 1, 0
      %v1569 = vlaneseq
      %v1570 = vshrl.u32 %v1569, 7
      %v1571 = vsub.s32 0, %v1570
      %v1572 = vrot.slane %v1568, %v1571
      %vm1573 = vcmp.eq.s32.totalorder %v1572, 1
      %v1574 = vsel %vm1573, 0.0, %v1559
      %v1575 = vsel %vm1573, 0.0, %v1560
      %v1576 = vsel %vm1573, 0.0, %v1561
      %v1577 = vsel %vm1573, 0.0, %v1562
      %v1578 = vsel %vm1573, 0.0, %v1563
      %v1579 = vsel %vm1573, 0.0, %v1564
      %v1580 = vsel %vm1573, 0.0, %v1565
      %v1581 = vsel %vm1573, 0.0, %v1566
      %1582 = vrot.lane.b32.xlu0 %v1019, 123
      %v1583 = vpop.permute.xlu0 %1582
      %1584 = vrot.lane.b32.xlu0 %v1020, 123
      %v1585 = vpop.permute.xlu0 %1584
      %1586 = vrot.lane.b32.xlu0 %v1021, 123
      %v1587 = vpop.permute.xlu0 %1586
      %1588 = vrot.lane.b32.xlu0 %v1022, 123
      %v1589 = vpop.permute.xlu0 %1588
      %1590 = vrot.lane.b32.xlu0 %v1023, 123
      %v1591 = vpop.permute.xlu0 %1590
      %1592 = vrot.lane.b32.xlu0 %v1024, 123
      %v1593 = vpop.permute.xlu0 %1592
      %1594 = vrot.lane.b32.xlu0 %v1025, 123
      %v1595 = vpop.permute.xlu0 %1594
      %1596 = vrot.lane.b32.xlu0 %v1026, 123
      %v1597 = vpop.permute.xlu0 %1596
      %vm1598 = vcmp.ge.s32.totalorder %v1028, 123
      %1599 = vrot.lane.b32.xlu0 %v759, 123
      %v1600 = vpop.permute.xlu0 %1599
      %1601 = vrot.lane.b32.xlu0 %v760, 123
      %v1602 = vpop.permute.xlu0 %1601
      %1603 = vrot.lane.b32.xlu0 %v761, 123
      %v1604 = vpop.permute.xlu0 %1603
      %1605 = vrot.lane.b32.xlu0 %v762, 123
      %v1606 = vpop.permute.xlu0 %1605
      %1607 = vrot.lane.b32.xlu0 %v763, 123
      %v1608 = vpop.permute.xlu0 %1607
      %1609 = vrot.lane.b32.xlu0 %v764, 123
      %v1610 = vpop.permute.xlu0 %1609
      %1611 = vrot.lane.b32.xlu0 %v765, 123
      %v1612 = vpop.permute.xlu0 %1611
      %1613 = vrot.lane.b32.xlu0 %v766, 123
      %v1614 = vpop.permute.xlu0 %1613
      %v1615 = vsel %vm1598, 1, 0
      %vm1616 = vcmp.eq.s32.totalorder %v1615, 1
      %v1617 = vsel %vm1616, %v1583, %v1600
      %v1618 = vsel %vm1616, %v1585, %v1602
      %v1619 = vsel %vm1616, %v1587, %v1604
      %v1620 = vsel %vm1616, %v1589, %v1606
      %v1621 = vsel %vm1616, %v1591, %v1608
      %v1622 = vsel %vm1616, %v1593, %v1610
      %v1623 = vsel %vm1616, %v1595, %v1612
      %v1624 = vsel %vm1616, %v1597, %v1614
      %vm1625 = vcmp.ge.s32.totalorder %v1029, 187
      %v1626 = vsel %vm1625, 1, 0
      %v1627 = vlaneseq
      %v1628 = vshrl.u32 %v1627, 7
      %v1629 = vsub.s32 0, %v1628
      %v1630 = vrot.slane %v1626, %v1629
      %vm1631 = vcmp.eq.s32.totalorder %v1630, 1
      %v1632 = vsel %vm1631, 0.0, %v1617
      %v1633 = vsel %vm1631, 0.0, %v1618
      %v1634 = vsel %vm1631, 0.0, %v1619
      %v1635 = vsel %vm1631, 0.0, %v1620
      %v1636 = vsel %vm1631, 0.0, %v1621
      %v1637 = vsel %vm1631, 0.0, %v1622
      %v1638 = vsel %vm1631, 0.0, %v1623
      %v1639 = vsel %vm1631, 0.0, %v1624
      %v1640 = vld [vmem:[%s9] sm:$0xff]
      %v1641 = vld [vmem:[%s9 + $0x8] sm:$0xff]
      %v1642 = vld [vmem:[%s9 + $0x10] sm:$0xff]
      %v1643 = vld [vmem:[%s9 + $0x18] sm:$0xff]
      %v1644 = vld [vmem:[%s9 + $0x20] sm:$0xff]
      %v1645 = vld [vmem:[%s9 + $0x28] sm:$0xff]
      %v1646 = vld [vmem:[%s9 + $0x30] sm:$0xff]
      %v1647 = vld [vmem:[%s9 + $0x38] sm:$0xff]
      %v1648 = vld [vmem:[%s9 + $0x40] sm:$0xff]
      %v1649 = vld [vmem:[%s9 + $0x48] sm:$0xff]
      %v1650 = vld [vmem:[%s9 + $0x50] sm:$0xff]
      %v1651 = vld [vmem:[%s9 + $0x58] sm:$0xff]
      %v1652 = vld [vmem:[%s9 + $0x60] sm:$0xff]
      %v1653 = vld [vmem:[%s9 + $0x68] sm:$0xff]
      %v1654 = vld [vmem:[%s9 + $0x70] sm:$0xff]
      %v1655 = vld [vmem:[%s9 + $0x78] sm:$0xff]
      %v1656 = vld [vmem:[%s9 + $0x80] sm:$0xff]
      %v1657 = vld [vmem:[%s9 + $0x88] sm:$0xff]
      %v1658 = vld [vmem:[%s9 + $0x90] sm:$0xff]
      %v1659 = vld [vmem:[%s9 + $0x98] sm:$0xff]
      %v1660 = vld [vmem:[%s9 + $0xa0] sm:$0xff]
      %v1661 = vld [vmem:[%s9 + $0xa8] sm:$0xff]
      %v1662 = vld [vmem:[%s9 + $0xb0] sm:$0xff]
      %v1663 = vld [vmem:[%s9 + $0xb8] sm:$0xff]
      %v1664 = vld [vmem:[%s9 + $0xc0] sm:$0xff]
      %v1665 = vld [vmem:[%s9 + $0xc8] sm:$0xff]
      %v1666 = vld [vmem:[%s9 + $0xd0] sm:$0xff]
      %v1667 = vld [vmem:[%s9 + $0xd8] sm:$0xff]
      %v1668 = vld [vmem:[%s9 + $0xe0] sm:$0xff]
      %v1669 = vld [vmem:[%s9 + $0xe8] sm:$0xff]
      %v1670 = vld [vmem:[%s9 + $0xf0] sm:$0xff]
      %v1671 = vld [vmem:[%s9 + $0xf8] sm:$0xff]
      %v1672 = vld [vmem:[%s10] sm:$0xff]
      %v1673 = vld [vmem:[%s10 + $0x8] sm:$0xff]
      %v1674 = vld [vmem:[%s10 + $0x10] sm:$0xff]
      %v1675 = vld [vmem:[%s10 + $0x18] sm:$0xff]
      %v1676 = vld [vmem:[%s10 + $0x20] sm:$0xff]
      %v1677 = vld [vmem:[%s10 + $0x28] sm:$0xff]
      %v1678 = vld [vmem:[%s10 + $0x30] sm:$0xff]
      %v1679 = vld [vmem:[%s10 + $0x38] sm:$0xff]
      %v1680 = vld [vmem:[%s10 + $0x40] sm:$0xff]
      %v1681 = vld [vmem:[%s10 + $0x48] sm:$0xff]
      %v1682 = vld [vmem:[%s10 + $0x50] sm:$0xff]
      %v1683 = vld [vmem:[%s10 + $0x58] sm:$0xff]
      %v1684 = vld [vmem:[%s10 + $0x60] sm:$0xff]
      %v1685 = vld [vmem:[%s10 + $0x68] sm:$0xff]
      %v1686 = vld [vmem:[%s10 + $0x70] sm:$0xff]
      %v1687 = vld [vmem:[%s10 + $0x78] sm:$0xff]
      %1689 = vset.pattern.permute.xlu0 0
      %1690 = vperm.xlu0 %1689, %v1672
      %v1691 = vpop.permute.xlu0 %1690
      %1694 = vset.pattern.permute.xlu0 0
      %1695 = vperm.xlu0 %1694, %v1673
      %v1696 = vpop.permute.xlu0 %1695
      %1699 = vset.pattern.permute.xlu0 0
      %1700 = vperm.xlu0 %1699, %v1674
      %v1701 = vpop.permute.xlu0 %1700
      %1704 = vset.pattern.permute.xlu0 0
      %1705 = vperm.xlu0 %1704, %v1675
      %v1706 = vpop.permute.xlu0 %1705
      %1709 = vset.pattern.permute.xlu0 0
      %1710 = vperm.xlu0 %1709, %v1676
      %v1711 = vpop.permute.xlu0 %1710
      %1714 = vset.pattern.permute.xlu0 0
      %1715 = vperm.xlu0 %1714, %v1677
      %v1716 = vpop.permute.xlu0 %1715
      %1719 = vset.pattern.permute.xlu0 0
      %1720 = vperm.xlu0 %1719, %v1678
      %v1721 = vpop.permute.xlu0 %1720
      %1724 = vset.pattern.permute.xlu0 0
      %1725 = vperm.xlu0 %1724, %v1679
      %v1726 = vpop.permute.xlu0 %1725
      %1729 = vset.pattern.permute.xlu0 0
      %1730 = vperm.xlu0 %1729, %v1680
      %v1731 = vpop.permute.xlu0 %1730
      %1734 = vset.pattern.permute.xlu0 0
      %1735 = vperm.xlu0 %1734, %v1681
      %v1736 = vpop.permute.xlu0 %1735
      %1739 = vset.pattern.permute.xlu0 0
      %1740 = vperm.xlu0 %1739, %v1682
      %v1741 = vpop.permute.xlu0 %1740
      %1744 = vset.pattern.permute.xlu0 0
      %1745 = vperm.xlu0 %1744, %v1683
      %v1746 = vpop.permute.xlu0 %1745
      %1749 = vset.pattern.permute.xlu0 0
      %1750 = vperm.xlu0 %1749, %v1684
      %v1751 = vpop.permute.xlu0 %1750
      %1754 = vset.pattern.permute.xlu0 0
      %1755 = vperm.xlu0 %1754, %v1685
      %v1756 = vpop.permute.xlu0 %1755
      %1759 = vset.pattern.permute.xlu0 0
      %1760 = vperm.xlu0 %1759, %v1686
      %v1761 = vpop.permute.xlu0 %1760
      %1764 = vset.pattern.permute.xlu0 0
      %1765 = vperm.xlu0 %1764, %v1687
      %v1766 = vpop.permute.xlu0 %1765
      %v1769 = vsel %vm1274, %v1641, 0
      %v1772 = vsel %vm1274, %v1643, 0
      %v1775 = vsel %vm1274, %v1645, 0
      %v1778 = vsel %vm1274, %v1647, 0
      %v1781 = vsel %vm1274, %v1649, 0
      %v1784 = vsel %vm1274, %v1651, 0
      %v1787 = vsel %vm1274, %v1653, 0
      %v1790 = vsel %vm1274, %v1655, 0
      %v1793 = vsel %vm1274, %v1657, 0
      %v1796 = vsel %vm1274, %v1659, 0
      %v1799 = vsel %vm1274, %v1661, 0
      %v1802 = vsel %vm1274, %v1663, 0
      %v1805 = vsel %vm1274, %v1665, 0
      %v1808 = vsel %vm1274, %v1667, 0
      %v1811 = vsel %vm1274, %v1669, 0
      %v1814 = vsel %vm1274, %v1671, 0
      %1816 = vmatprep.subr.mxu0 0.0
      %1817 = vmatpush1.msra.mxu0 %v1574
      %1818 = vmatprep.subr.mxu0 0.0
      %1819 = vmatpush1.msra.mxu0 %v1575
      %1820 = vmatprep.subr.mxu0 0.0
      %1821 = vmatpush1.msra.mxu0 %v1576
      %1822 = vmatprep.subr.mxu0 0.0
      %1823 = vmatpush1.msra.mxu0 %v1577
      %1824 = vmatprep.subr.mxu0 0.0
      %1825 = vmatpush1.msra.mxu0 %v1578
      %1826 = vmatprep.subr.mxu0 0.0
      %1827 = vmatpush1.msra.mxu0 %v1579
      %1828 = vmatprep.subr.mxu0 0.0
      %1829 = vmatpush1.msra.mxu0 %v1580
      %1830 = vmatprep.subr.mxu0 0.0
      %1831 = vmatpush1.msra.mxu0 %v1581
      %1832 = vmatprep.subr.mxu0 0.0
      %1833 = vmatpush1.msra.mxu0 %v759
      %1834 = vmatprep.subr.mxu0 0.0
      %1835 = vmatpush1.msra.mxu0 %v760
      %1836 = vmatprep.subr.mxu0 0.0
      %1837 = vmatpush1.msra.mxu0 %v761
      %1838 = vmatprep.subr.mxu0 0.0
      %1839 = vmatpush1.msra.mxu0 %v762
      %1840 = vmatprep.subr.mxu0 0.0
      %1841 = vmatpush1.msra.mxu0 %v763
      %1842 = vmatprep.subr.mxu0 0.0
      %1843 = vmatpush1.msra.mxu0 %v764
      %1844 = vmatprep.subr.mxu0 0.0
      %1845 = vmatpush1.msra.mxu0 %v765
      %1846 = vmatprep.subr.mxu0 0.0
      %1847 = vmatpush1.msra.mxu0 %v766
      %1848 = vmatprep.subr.mxu0 0.0
      %1849 = vmatpush1.msra.mxu0 %v1632
      %1850 = vmatprep.subr.mxu0 0.0
      %1851 = vmatpush1.msra.mxu0 %v1633
      %1852 = vmatprep.subr.mxu0 0.0
      %1853 = vmatpush1.msra.mxu0 %v1634
      %1854 = vmatprep.subr.mxu0 0.0
      %1855 = vmatpush1.msra.mxu0 %v1635
      %1856 = vmatprep.subr.mxu0 0.0
      %1857 = vmatpush1.msra.mxu0 %v1636
      %1858 = vmatprep.subr.mxu0 0.0
      %1859 = vmatpush1.msra.mxu0 %v1637
      %1860 = vmatprep.subr.mxu0 0.0
      %1861 = vmatpush1.msra.mxu0 %v1638
      %1862 = vmatprep.subr.mxu0 0.0
      %1863 = vmatpush1.msra.mxu0 %v1639
      %1864 = vmatprep.subr.mxu0 0.0
      %1865 = vmatpush1.msra.mxu0 0.0
      %1866 = vmatprep.subr.mxu0 0.0
      %1867 = vmatpush1.msra.mxu0 0.0
      %1868 = vmatprep.subr.mxu0 0.0
      %1869 = vmatpush1.msra.mxu0 0.0
      %1870 = vmatprep.subr.mxu0 0.0
      %1871 = vmatpush1.msra.mxu0 0.0
      %1872 = vmatprep.subr.mxu0 0.0
      %1873 = vmatpush1.msra.mxu0 0.0
      %1874 = vmatprep.subr.mxu0 0.0
      %1875 = vmatpush1.msra.mxu0 0.0
      %1876 = vmatprep.subr.mxu0 0.0
      %1877 = vmatpush1.msra.mxu0 0.0
      %1878 = vmatprep.subr.mxu0 0.0
      %1879 = vmatpush1.msra.mxu0 0.0
      %1880 = vmatprep.mubr.f32.mxu0 %v1769
      %1881 = vmatmul.mubr.f32.gmra.mrb[0].mxu0 %v1640
      %v1882 = vpop.f32.mrb[0].mxu0
      %v1883 = vadd.f32 %v1691, %v1882
      %v1884 = vpop.f32.mrb[0].mxu0
      %1885 = vmatprep.mubr.f32.mxu0 %v1772
      %1886 = vmatmul.mubr.f32.gmra.mrb[0].mxu0 %v1642
      %v1887 = vpop.f32.mrb[0].mxu0
      %v1888 = vadd.f32 %v1696, %v1887
      %v1889 = vpop.f32.mrb[0].mxu0
      %1890 = vmatprep.mubr.f32.mxu0 %v1775
      %1891 = vmatmul.mubr.f32.gmra.mrb[0].mxu0 %v1644
      %v1892 = vpop.f32.mrb[0].mxu0
      %v1893 = vadd.f32 %v1701, %v1892
      %v1894 = vpop.f32.mrb[0].mxu0
      %1895 = vmatprep.mubr.f32.mxu0 %v1778
      %1896 = vmatmul.mubr.f32.gmra.mrb[0].mxu0 %v1646
      %v1897 = vpop.f32.mrb[0].mxu0
      %v1898 = vadd.f32 %v1706, %v1897
      %v1899 = vpop.f32.mrb[0].mxu0
      %1900 = vmatprep.mubr.f32.mxu0 %v1781
      %1901 = vmatmul.mubr.f32.gmra.mrb[0].mxu0 %v1648
      %v1902 = vpop.f32.mrb[0].mxu0
      %v1903 = vadd.f32 %v1711, %v1902
      %v1904 = vpop.f32.mrb[0].mxu0
      %1905 = vmatprep.mubr.f32.mxu0 %v1784
      %1906 = vmatmul.mubr.f32.gmra.mrb[0].mxu0 %v1650
      %v1907 = vpop.f32.mrb[0].mxu0
      %v1908 = vadd.f32 %v1716, %v1907
      %v1909 = vpop.f32.mrb[0].mxu0
      %1910 = vmatprep.mubr.f32.mxu0 %v1787
      %1911 = vmatmul.mubr.f32.gmra.mrb[0].mxu0 %v1652
      %v1912 = vpop.f32.mrb[0].mxu0
      %v1913 = vadd.f32 %v1721, %v1912
      %v1914 = vpop.f32.mrb[0].mxu0
      %1915 = vmatprep.mubr.f32.mxu0 %v1790
      %1916 = vmatmul.mubr.f32.gmra.mrb[0].mxu0 %v1654
      %v1917 = vpop.f32.mrb[0].mxu0
      %v1918 = vadd.f32 %v1726, %v1917
      %v1919 = vpop.f32.mrb[0].mxu0
      %1920 = vmatprep.mubr.f32.mxu0 %v1793
      %1921 = vmatmul.mubr.f32.gmra.mrb[0].mxu0 %v1656
      %v1922 = vpop.f32.mrb[0].mxu0
      %v1923 = vadd.f32 %v1731, %v1922
      %v1924 = vpop.f32.mrb[0].mxu0
      %1925 = vmatprep.mubr.f32.mxu0 %v1796
      %1926 = vmatmul.mubr.f32.gmra.mrb[0].mxu0 %v1658
      %v1927 = vpop.f32.mrb[0].mxu0
      %v1928 = vadd.f32 %v1736, %v1927
      %v1929 = vpop.f32.mrb[0].mxu0
      %1930 = vmatprep.mubr.f32.mxu0 %v1799
      %1931 = vmatmul.mubr.f32.gmra.mrb[0].mxu0 %v1660
      %v1932 = vpop.f32.mrb[0].mxu0
      %v1933 = vadd.f32 %v1741, %v1932
      %v1934 = vpop.f32.mrb[0].mxu0
      %1935 = vmatprep.mubr.f32.mxu0 %v1802
      %1936 = vmatmul.mubr.f32.gmra.mrb[0].mxu0 %v1662
      %v1937 = vpop.f32.mrb[0].mxu0
      %v1938 = vadd.f32 %v1746, %v1937
      %v1939 = vpop.f32.mrb[0].mxu0
      %1940 = vmatprep.mubr.f32.mxu0 %v1805
      %1941 = vmatmul.mubr.f32.gmra.mrb[0].mxu0 %v1664
      %v1942 = vpop.f32.mrb[0].mxu0
      %v1943 = vadd.f32 %v1751, %v1942
      %v1944 = vpop.f32.mrb[0].mxu0
      %1945 = vmatprep.mubr.f32.mxu0 %v1808
      %1946 = vmatmul.mubr.f32.gmra.mrb[0].mxu0 %v1666
      %v1947 = vpop.f32.mrb[0].mxu0
      %v1948 = vadd.f32 %v1756, %v1947
      %v1949 = vpop.f32.mrb[0].mxu0
      %1950 = vmatprep.mubr.f32.mxu0 %v1811
      %1951 = vmatmul.mubr.f32.gmra.mrb[0].mxu0 %v1668
      %v1952 = vpop.f32.mrb[0].mxu0
      %v1953 = vadd.f32 %v1761, %v1952
      %v1954 = vpop.f32.mrb[0].mxu0
      %1955 = vmatprep.mubr.f32.mxu0 %v1814
      %1956 = vmatmul.mubr.f32.gmra.mrb[0].mxu0 %v1670
      %v1957 = vpop.f32.mrb[0].mxu0
      %v1958 = vadd.f32 %v1766, %v1957
      %v1959 = vpop.f32.mrb[0].mxu0
      %1960 = vdwg.mxu0
      %v1961 = vxor.u32 %v1923, 2147483648
      %v1962 = vxor.u32 %v1928, 2147483648
      %v1963 = vxor.u32 %v1933, 2147483648
      %v1964 = vxor.u32 %v1938, 2147483648
      %v1965 = vxor.u32 %v1943, 2147483648
      %v1966 = vxor.u32 %v1948, 2147483648
      %v1967 = vxor.u32 %v1953, 2147483648
      %v1968 = vxor.u32 %v1958, 2147483648
      %v1969 = vmul.f32 %v1961, 1.442695
      %v1970 = vpow.pop %v1969
      %v1971 = vmul.f32 %v1962, 1.442695
      %v1972 = vpow.pop %v1971
      %v1973 = vmul.f32 %v1963, 1.442695
      %v1974 = vpow.pop %v1973
      %v1975 = vmul.f32 %v1964, 1.442695
      %v1976 = vpow.pop %v1975
      %v1977 = vmul.f32 %v1965, 1.442695
      %v1978 = vpow.pop %v1977
      %v1979 = vmul.f32 %v1966, 1.442695
      %v1980 = vpow.pop %v1979
      %v1981 = vmul.f32 %v1967, 1.442695
      %v1982 = vpow.pop %v1981
      %v1983 = vmul.f32 %v1968, 1.442695
      %v1984 = vpow.pop %v1983
      %v1985 = vadd.f32 %v1970, 1.0
      %v1986 = vadd.f32 %v1972, 1.0
      %v1987 = vadd.f32 %v1974, 1.0
      %v1988 = vadd.f32 %v1976, 1.0
      %v1989 = vadd.f32 %v1978, 1.0
      %v1990 = vadd.f32 %v1980, 1.0
      %v1991 = vadd.f32 %v1982, 1.0
      %v1992 = vadd.f32 %v1984, 1.0
      %v1993 = vrcp.pop %v1985
      %v1994 = vmul.f32 1.0, %v1993
      %v1995 = vrcp.pop %v1986
      %v1996 = vmul.f32 1.0, %v1995
      %v1997 = vrcp.pop %v1987
      %v1998 = vmul.f32 1.0, %v1997
      %v1999 = vrcp.pop %v1988
      %v2000 = vmul.f32 1.0, %v1999
      %v2001 = vrcp.pop %v1989
      %v2002 = vmul.f32 1.0, %v2001
      %v2003 = vrcp.pop %v1990
      %v2004 = vmul.f32 1.0, %v2003
      %v2005 = vrcp.pop %v1991
      %v2006 = vmul.f32 1.0, %v2005
      %v2007 = vrcp.pop %v1992
      %v2008 = vmul.f32 1.0, %v2007
      %v2009 = vmul.f32 %v1883, %v1994
      %v2010 = vmul.f32 %v1888, %v1996
      %v2011 = vmul.f32 %v1893, %v1998
      %v2012 = vmul.f32 %v1898, %v2000
      %v2013 = vmul.f32 %v1903, %v2002
      %v2014 = vmul.f32 %v1908, %v2004
      %v2015 = vmul.f32 %v1913, %v2006
      %v2016 = vmul.f32 %v1918, %v2008
      %v2017 = vld [vmem:[%s11] sm:$0xff]
      %v2018 = vld [vmem:[%s12] sm:$0xff]
      %v2020 = vsel %vm1274, %v2018, 0
      %2022 = vmatprep.subr.mxu0 0.0
      %2023 = vmatpush1.msra.mxu0 %v2009
      %2024 = vmatprep.subr.mxu0 0.0
      %2025 = vmatpush1.msra.mxu0 %v2010
      %2026 = vmatprep.subr.mxu0 0.0
      %2027 = vmatpush1.msra.mxu0 %v2011
      %2028 = vmatprep.subr.mxu0 0.0
      %2029 = vmatpush1.msra.mxu0 %v2012
      %2030 = vmatprep.subr.mxu0 0.0
      %2031 = vmatpush1.msra.mxu0 %v2013
      %2032 = vmatprep.subr.mxu0 0.0
      %2033 = vmatpush1.msra.mxu0 %v2014
      %2034 = vmatprep.subr.mxu0 0.0
      %2035 = vmatpush1.msra.mxu0 %v2015
      %2036 = vmatprep.subr.mxu0 0.0
      %2037 = vmatpush1.msra.mxu0 %v2016
      %2038 = vmatprep.subr.mxu0 0.0
      %2039 = vmatpush1.msra.mxu0 0.0
      %2040 = vmatprep.subr.mxu0 0.0
      %2041 = vmatpush1.msra.mxu0 0.0
      %2042 = vmatprep.subr.mxu0 0.0
      %2043 = vmatpush1.msra.mxu0 0.0
      %2044 = vmatprep.subr.mxu0 0.0
      %2045 = vmatpush1.msra.mxu0 0.0
      %2046 = vmatprep.subr.mxu0 0.0
      %2047 = vmatpush1.msra.mxu0 0.0
      %2048 = vmatprep.subr.mxu0 0.0
      %2049 = vmatpush1.msra.mxu0 0.0
      %2050 = vmatprep.subr.mxu0 0.0
      %2051 = vmatpush1.msra.mxu0 0.0
      %2052 = vmatprep.subr.mxu0 0.0
      %2053 = vmatpush1.msra.mxu0 0.0
      %2054 = vmatprep.subr.mxu0 0.0
      %2055 = vmatpush1.msra.mxu0 0.0
      %2056 = vmatprep.subr.mxu0 0.0
      %2057 = vmatpush1.msra.mxu0 0.0
      %2058 = vmatprep.subr.mxu0 0.0
      %2059 = vmatpush1.msra.mxu0 0.0
      %2060 = vmatprep.subr.mxu0 0.0
      %2061 = vmatpush1.msra.mxu0 0.0
      %2062 = vmatprep.subr.mxu0 0.0
      %2063 = vmatpush1.msra.mxu0 0.0
      %2064 = vmatprep.subr.mxu0 0.0
      %2065 = vmatpush1.msra.mxu0 0.0
      %2066 = vmatprep.subr.mxu0 0.0
      %2067 = vmatpush1.msra.mxu0 0.0
      %2068 = vmatprep.subr.mxu0 0.0
      %2069 = vmatpush1.msra.mxu0 0.0
      %2070 = vmatprep.subr.mxu0 0.0
      %2071 = vmatpush1.msra.mxu0 0.0
      %2072 = vmatprep.subr.mxu0 0.0
      %2073 = vmatpush1.msra.mxu0 0.0
      %2074 = vmatprep.subr.mxu0 0.0
      %2075 = vmatpush1.msra.mxu0 0.0
      %2076 = vmatprep.subr.mxu0 0.0
      %2077 = vmatpush1.msra.mxu0 0.0
      %2078 = vmatprep.subr.mxu0 0.0
      %2079 = vmatpush1.msra.mxu0 0.0
      %2080 = vmatprep.subr.mxu0 0.0
      %2081 = vmatpush1.msra.mxu0 0.0
      %2082 = vmatprep.subr.mxu0 0.0
      %2083 = vmatpush1.msra.mxu0 0.0
      %2084 = vmatprep.subr.mxu0 0.0
      %2085 = vmatpush1.msra.mxu0 0.0
      %2086 = vmatprep.mubr.f32.mxu0 0.0
      %2087 = vmatmul.mubr.f32.gmra.mrb[0].mxu0 %v2020
      %v2088 = vpop.f32.mrb[0].mxu0
      %v2089 = vadd.f32 0.0, %v2088
      %v2090 = vpop.f32.mrb[0].mxu0
      %2091 = vdwg.mxu0
      %v2093 = vsel %vm1274, %v2017, 0
      %2095 = vmatprep.subr.mxu0 0.0
      %2096 = vmatpush1.msra.mxu0 %v1516
      %2097 = vmatprep.subr.mxu0 0.0
      %2098 = vmatpush1.msra.mxu0 %v1517
      %2099 = vmatprep.subr.mxu0 0.0
      %2100 = vmatpush1.msra.mxu0 %v1518
      %2101 = vmatprep.subr.mxu0 0.0
      %2102 = vmatpush1.msra.mxu0 %v1519
      %2103 = vmatprep.subr.mxu0 0.0
      %2104 = vmatpush1.msra.mxu0 %v1520
      %2105 = vmatprep.subr.mxu0 0.0
      %2106 = vmatpush1.msra.mxu0 %v1521
      %2107 = vmatprep.subr.mxu0 0.0
      %2108 = vmatpush1.msra.mxu0 %v1522
      %2109 = vmatprep.subr.mxu0 0.0
      %2110 = vmatpush1.msra.mxu0 %v1523
      %2111 = vmatprep.subr.mxu0 0.0
      %2112 = vmatpush1.msra.mxu0 0.0
      %2113 = vmatprep.subr.mxu0 0.0
      %2114 = vmatpush1.msra.mxu0 0.0
      %2115 = vmatprep.subr.mxu0 0.0
      %2116 = vmatpush1.msra.mxu0 0.0
      %2117 = vmatprep.subr.mxu0 0.0
      %2118 = vmatpush1.msra.mxu0 0.0
      %2119 = vmatprep.subr.mxu0 0.0
      %2120 = vmatpush1.msra.mxu0 0.0
      %2121 = vmatprep.subr.mxu0 0.0
      %2122 = vmatpush1.msra.mxu0 0.0
      %2123 = vmatprep.subr.mxu0 0.0
      %2124 = vmatpush1.msra.mxu0 0.0
      %2125 = vmatprep.subr.mxu0 0.0
      %2126 = vmatpush1.msra.mxu0 0.0
      %2127 = vmatprep.subr.mxu0 0.0
      %2128 = vmatpush1.msra.mxu0 0.0
      %2129 = vmatprep.subr.mxu0 0.0
      %2130 = vmatpush1.msra.mxu0 0.0
      %2131 = vmatprep.subr.mxu0 0.0
      %2132 = vmatpush1.msra.mxu0 0.0
      %2133 = vmatprep.subr.mxu0 0.0
      %2134 = vmatpush1.msra.mxu0 0.0
      %2135 = vmatprep.subr.mxu0 0.0
      %2136 = vmatpush1.msra.mxu0 0.0
      %2137 = vmatprep.subr.mxu0 0.0
      %2138 = vmatpush1.msra.mxu0 0.0
      %2139 = vmatprep.subr.mxu0 0.0
      %2140 = vmatpush1.msra.mxu0 0.0
      %2141 = vmatprep.subr.mxu0 0.0
      %2142 = vmatpush1.msra.mxu0 0.0
      %2143 = vmatprep.subr.mxu0 0.0
      %2144 = vmatpush1.msra.mxu0 0.0
      %2145 = vmatprep.subr.mxu0 0.0
      %2146 = vmatpush1.msra.mxu0 0.0
      %2147 = vmatprep.subr.mxu0 0.0
      %2148 = vmatpush1.msra.mxu0 0.0
      %2149 = vmatprep.subr.mxu0 0.0
      %2150 = vmatpush1.msra.mxu0 0.0
      %2151 = vmatprep.subr.mxu0 0.0
      %2152 = vmatpush1.msra.mxu0 0.0
      %2153 = vmatprep.subr.mxu0 0.0
      %2154 = vmatpush1.msra.mxu0 0.0
      %2155 = vmatprep.subr.mxu0 0.0
      %2156 = vmatpush1.msra.mxu0 0.0
      %2157 = vmatprep.subr.mxu0 0.0
      %2158 = vmatpush1.msra.mxu0 0.0
      %2159 = vmatprep.mubr.f32.mxu0 0.0
      %2160 = vmatmul.mubr.f32.gmra.mrb[0].mxu0 %v2093
      %v2161 = vpop.f32.mrb[0].mxu0
      %v2162 = vadd.f32 %v2089, %v2161
      %v2163 = vpop.f32.mrb[0].mxu0
      %2164 = vdwg.mxu0
      %v2165 = vld [vmem:[%s13] sm:$0xff]
      %2167 = vset.pattern.permute.xlu0 0
      %2168 = vperm.xlu0 %2167, %v2165
      %v2169 = vpop.permute.xlu0 %2168
      %v2171 = vadd.f32 %v2162, %v2169
      %v2172 = vadd.f32 %v2171, %v571
      %2173 = vst [vmem:[%s553] sm:$0xff] %v2172
      %p2174 = scmp.lt.s32.totalorder %s26, 2
      %s2175 = scalar_select %p2174, %s26, 2
      %s2176 = smul.addr %s2175, 8
      %s2177 = scalar_lea.vmem %s14, %s2176
      // Predicated region
      $region77: #{csr_res_block.1} parent=75 // pred_check
        %p2178 = pneg %p370
      $region78: #{csr_res_block.1} parent=75 // pred_check_branch
        %2180 = sbr.rel (%p2178) target = $region80
      $region79: #{csr_res_block.1} parent=75 // pred_region
        _
      $region80: #{csr_res_block.1} parent=75 // pred_fallthru
        _
    $region76: #{csr_res_block.1} parent=5 // pred_fallthru
      _
    %p2181 = scmp.le.s32.totalorder 2, %s21
    // Predicated region
    $region81: #{csr_res_block.1} parent=5 // pred_check
      %p2182 = pneg %p2181
    $region82: #{csr_res_block.1} parent=5 // pred_check_branch
      %2184 = sbr.rel (%p2182) target = $region84
    $region83: #{csr_res_block.1} parent=5 // pred_region
      %s2185 = ssub.s32 %s21, 2
      // Predicated region
      $region85: #{csr_res_block.1} parent=83 // pred_check
        %p2186 = pneg %p376
      $region86: #{csr_res_block.1} parent=83 // pred_check_branch
        %2188 = sbr.rel (%p2186) target = $region88
      $region87: #{csr_res_block.1} parent=83 // pred_region
        %p2189 = scmp.lt.s32.totalorder %s27, 2
        %s2190 = scalar_select %p2189, %s27, 2
        %s2191 = smul.addr %s2190, 8
        %s2192 = scalar_lea.vmem %s14, %s2191
      $region88: #{csr_res_block.1} parent=83 // pred_fallthru
        _
    $region84: #{csr_res_block.1} parent=5 // pred_fallthru
      _
  $region6: #{csr_res_block.1} parent=0 // loop_footer
    %s25 = sadd.s32 1, %s21
  $region7: #{csr_res_block.1} parent=0 // loop_footer_branch
    %20 = sbr.rel target = $region3
  $region8: #{csr_res_block.1} parent=0 // loop_exit
    _

</llo_original>
